<compile_context>
chip_gen: v6e
topology: v6e:2x2x1
jax: 0.10.0
libtpu: 0.0.40
codegen_flags: <defaults>
</compile_context>

<pallas_src>
import functools

import jax
import jax.numpy as jnp
from jax import lax
from jax.experimental import pallas as pl
from jax.experimental.pallas import tpu as pltpu


# ---------------------------------------------------------------------------
# Kernel
# ---------------------------------------------------------------------------
def stylemlp_kernel(z_ref, w_ref, b_ref, out_ref, *, n_layers):
    """z_ref: (TILE_N, D); w_ref: (L, D, D); b_ref: (L, 1, D); out_ref: (TILE_N, D)."""
    z = z_ref[...].astype(jnp.float32)

    # F.normalize(z, p=2, dim=-1): z / max(||z||_2, eps), eps = 1e-12.
    # Equivalent rsqrt form (EUP op, no VPU divide): z * rsqrt(max(sumsq, eps^2)).
    sumsq = jnp.sum(z * z, axis=-1, keepdims=True)
    z = z * lax.rsqrt(jnp.maximum(sumsq, 1e-24))

    # L linear layers, each followed by LeakyReLU(0.2) (fc_out also activated,
    # matching output_act=True).  Padded weight rows/cols and biases are zero,
    # so padded lanes carry exact zeros through the whole stack.
    for i in range(n_layers):
        w = w_ref[i]                       # (D, D), static slice of the stacked weights
        b = b_ref[i].astype(jnp.float32)   # (1, D)
        z = jnp.dot(z.astype(w.dtype), w, preferred_element_type=jnp.float32) + b
        z = jnp.maximum(z, 0.2 * z)        # LeakyReLU(0.2) as a single vmax

    out_ref[...] = z.astype(out_ref.dtype)


# ---------------------------------------------------------------------------
# Wrapper
# ---------------------------------------------------------------------------
def _round_up(x, m):
    return -(-x // m) * m


def style_mlp(z, weights, biases, *, tile_n=128):
    """z: (N, style_dim); weights[i]: (in_i, out_i); biases[i]: (out_i,) or (1, out_i)."""
    n, style_dim = z.shape
    out_dim = weights[-1].shape[1]
    n_layers = len(weights)

    # Common, lane-aligned feature dim covering every in/out dim.
    dims = [style_dim] + [w.shape[1] for w in weights]
    d_pad = _round_up(max(max(dims), 128), 128)

    # Fuse all parameters into two stacked, zero-padded operands.
    p_dtype = weights[0].dtype
    w_all = jnp.zeros((n_layers, d_pad, d_pad), p_dtype)
    b_all = jnp.zeros((n_layers, 1, d_pad), p_dtype)
    for i, (w, b) in enumerate(zip(weights, biases)):
        w_all = w_all.at[i, : w.shape[0], : w.shape[1]].set(w)
        b2 = jnp.reshape(b, (1, -1))
        b_all = b_all.at[i, :, : b2.shape[1]].set(b2)

    # Pad the batch to a multiple of tile_n and the feature dim to d_pad (zeros).
    n_pad = _round_up(n, tile_n)
    z_pad = jnp.zeros((n_pad, d_pad), z.dtype).at[:n, :style_dim].set(z)

    grid = (n_pad // tile_n,)
    out_pad = pl.pallas_call(
        functools.partial(stylemlp_kernel, n_layers=n_layers),
        out_shape=jax.ShapeDtypeStruct((n_pad, d_pad), jnp.float32),
        grid=grid,
        in_specs=[
            pl.BlockSpec((tile_n, d_pad), lambda i: (i, 0)),
            # Constant block index -> weights/biases stay VMEM-resident across N tiles.
            pl.BlockSpec((n_layers, d_pad, d_pad), lambda i: (0, 0, 0)),
            pl.BlockSpec((n_layers, 1, d_pad), lambda i: (0, 0, 0)),
        ],
        out_specs=pl.BlockSpec((tile_n, d_pad), lambda i: (i, 0)),
        compiler_params=pltpu.CompilerParams(dimension_semantics=("parallel",)),
    )(z_pad, w_all, b_all)

    return out_pad[:n, :out_dim]


# Pure-JAX reference (sanity check only).
def style_mlp_ref(z, weights, biases):
    z = z / jnp.maximum(jnp.linalg.norm(z, axis=-1, keepdims=True), 1e-12)
    for w, b in zip(weights, biases):
        z = z @ w + jnp.reshape(b, (1, -1))
        z = jnp.where(z > 0, z, 0.2 * z)
    return z


# ---------------------------------------------------------------------------
# Main
# ---------------------------------------------------------------------------
if __name__ == "__main__":
    # StyleMLP hyper-parameters (small, lane-aligned).
    N = 256               # batch of style codes (2 grid tiles of 128 rows)
    STYLE_DIM = 32
    HIDDEN = 128          # hidden_channels
    OUT_DIM = 64
    NUM_LAYERS = 5        # number of fc_layers (fc_out is additional)

    key = jax.random.PRNGKey(0)

    # Layer shapes follow __init__: style->hidden, (num_layers-1)x hidden->hidden, fc_out.
    layer_dims = [(STYLE_DIM, HIDDEN)]
    for _ in range(NUM_LAYERS - 1):
        layer_dims.append((HIDDEN, HIDDEN))
    layer_dims.append((HIDDEN, OUT_DIM))

    weights, biases = [], []
    for d_in, d_out in layer_dims:
        kw, kb, key = jax.random.split(key, 3)
        scale = 1.0 / jnp.sqrt(jnp.float32(d_in))
        weights.append(jax.random.uniform(
            kw, (d_in, d_out), jnp.float32, minval=-scale, maxval=scale))
        biases.append(jax.random.uniform(
            kb, (1, d_out), jnp.float32, minval=-scale, maxval=scale))

    kz, key = jax.random.split(key)
    z = jax.random.normal(kz, (N, STYLE_DIM), jnp.float32)

    out = style_mlp(z, weights, biases)
    out = jax.block_until_ready(out)

    ref = style_mlp_ref(z, weights, biases)
    assert out.shape == (N, OUT_DIM)
    assert jnp.allclose(out, ref, atol=1e-4, rtol=1e-4), "mismatch vs JAX reference"

    print("KERNEL_OK")
</pallas_src>

<mosaic_0001>
module attributes {stable_mosaic.version = 11 : i64} {
  func.func @stylemlp_kernel(%arg0: i32, %arg1: memref<128x128xf32, #tpu.memory_space<vmem>>, %arg2: memref<6x128x128xf32, #tpu.memory_space<vmem>>, %arg3: memref<6x1x128xf32, #tpu.memory_space<vmem>>, %arg4: memref<128x128xf32, #tpu.memory_space<vmem>>) attributes {dimension_semantics = [#tpu.dimension_semantics<parallel>], iteration_bounds = array<i64: 2>, scalar_prefetch = 0 : i64, scratch_operands = 0 : i64, tpu.core_type = #tpu.core_type<tc>, window_params = [{transform_indices = @transform_0, window_bounds = array<i64: 128, 128>}, {pipeline_mode = #tpu.pipeline_mode<synchronous>, transform_indices = @transform_1, window_bounds = array<i64: 6, 128, 128>}, {pipeline_mode = #tpu.pipeline_mode<synchronous>, transform_indices = @transform_2, window_bounds = array<i64: 6, 1, 128>}, {transform_indices = @transform_3, window_bounds = array<i64: 128, 128>}]} {
    %c0 = arith.constant 0 : index
    %c0_0 = arith.constant 0 : index
    %0 = vector.load %arg1[%c0, %c0_0] : memref<128x128xf32, #tpu.memory_space<vmem>>, vector<128x128xf32>
    %1 = arith.mulf %0, %0 : vector<128x128xf32>
    %cst = arith.constant dense<0.000000e+00> : vector<128xf32>
    %2 = vector.multi_reduction <add>, %1, %cst [1] : vector<128x128xf32> to vector<128xf32>
    %3 = vector.shape_cast %2 : vector<128xf32> to vector<128x1xf32>
    %cst_1 = arith.constant 1.000000e-24 : f32
    %4 = vector.broadcast %cst_1 : f32 to vector<128x1xf32>
    %5 = arith.maximumf %3, %4 : vector<128x1xf32>
    %6 = math.rsqrt %5 : vector<128x1xf32>
    %7 = vector.broadcast %6 : vector<128x1xf32> to vector<128x128xf32>
    %8 = arith.mulf %0, %7 : vector<128x128xf32>
    %c0_2 = arith.constant 0 : index
    %c0_3 = arith.constant 0 : index
    %c0_4 = arith.constant 0 : index
    %9 = vector.load %arg2[%c0_2, %c0_3, %c0_4] : memref<6x128x128xf32, #tpu.memory_space<vmem>>, vector<1x128x128xf32>
    %10 = vector.shape_cast %9 : vector<1x128x128xf32> to vector<128x128xf32>
    %c0_5 = arith.constant 0 : index
    %c0_6 = arith.constant 0 : index
    %c0_7 = arith.constant 0 : index
    %11 = vector.load %arg3[%c0_5, %c0_6, %c0_7] : memref<6x1x128xf32, #tpu.memory_space<vmem>>, vector<1x1x128xf32>
    %12 = vector.shape_cast %11 : vector<1x1x128xf32> to vector<1x128xf32>
    %cst_8 = arith.constant dense<0.000000e+00> : vector<128x128xf32>
    %13 = tpu.matmul %8, %10, %cst_8 {dimension_numbers = #tpu.dot_dimension_numbers<[1], [0], [0], [1], [0, 0, 1, 1], [], []>} : vector<128x128xf32>, vector<128x128xf32>, vector<128x128xf32> -> vector<128x128xf32>
    %14 = vector.broadcast %12 : vector<1x128xf32> to vector<128x128xf32>
    %15 = arith.addf %13, %14 : vector<128x128xf32>
    %cst_9 = arith.constant 2.000000e-01 : f32
    %16 = vector.broadcast %cst_9 : f32 to vector<128x128xf32>
    %17 = arith.mulf %16, %15 : vector<128x128xf32>
    %18 = arith.maximumf %15, %17 : vector<128x128xf32>
    %c1 = arith.constant 1 : index
    %c0_10 = arith.constant 0 : index
    %c0_11 = arith.constant 0 : index
    %19 = vector.load %arg2[%c1, %c0_10, %c0_11] : memref<6x128x128xf32, #tpu.memory_space<vmem>>, vector<1x128x128xf32>
    %20 = vector.shape_cast %19 : vector<1x128x128xf32> to vector<128x128xf32>
    %c1_12 = arith.constant 1 : index
    %c0_13 = arith.constant 0 : index
    %c0_14 = arith.constant 0 : index
    %21 = vector.load %arg3[%c1_12, %c0_13, %c0_14] : memref<6x1x128xf32, #tpu.memory_space<vmem>>, vector<1x1x128xf32>
    %22 = vector.shape_cast %21 : vector<1x1x128xf32> to vector<1x128xf32>
    %cst_15 = arith.constant dense<0.000000e+00> : vector<128x128xf32>
    %23 = tpu.matmul %18, %20, %cst_15 {dimension_numbers = #tpu.dot_dimension_numbers<[1], [0], [0], [1], [0, 0, 1, 1], [], []>} : vector<128x128xf32>, vector<128x128xf32>, vector<128x128xf32> -> vector<128x128xf32>
    %24 = vector.broadcast %22 : vector<1x128xf32> to vector<128x128xf32>
    %25 = arith.addf %23, %24 : vector<128x128xf32>
    %cst_16 = arith.constant 2.000000e-01 : f32
    %26 = vector.broadcast %cst_16 : f32 to vector<128x128xf32>
    %27 = arith.mulf %26, %25 : vector<128x128xf32>
    %28 = arith.maximumf %25, %27 : vector<128x128xf32>
    %c2 = arith.constant 2 : index
    %c0_17 = arith.constant 0 : index
    %c0_18 = arith.constant 0 : index
    %29 = vector.load %arg2[%c2, %c0_17, %c0_18] : memref<6x128x128xf32, #tpu.memory_space<vmem>>, vector<1x128x128xf32>
    %30 = vector.shape_cast %29 : vector<1x128x128xf32> to vector<128x128xf32>
    %c2_19 = arith.constant 2 : index
    %c0_20 = arith.constant 0 : index
    %c0_21 = arith.constant 0 : index
    %31 = vector.load %arg3[%c2_19, %c0_20, %c0_21] : memref<6x1x128xf32, #tpu.memory_space<vmem>>, vector<1x1x128xf32>
    %32 = vector.shape_cast %31 : vector<1x1x128xf32> to vector<1x128xf32>
    %cst_22 = arith.constant dense<0.000000e+00> : vector<128x128xf32>
    %33 = tpu.matmul %28, %30, %cst_22 {dimension_numbers = #tpu.dot_dimension_numbers<[1], [0], [0], [1], [0, 0, 1, 1], [], []>} : vector<128x128xf32>, vector<128x128xf32>, vector<128x128xf32> -> vector<128x128xf32>
    %34 = vector.broadcast %32 : vector<1x128xf32> to vector<128x128xf32>
    %35 = arith.addf %33, %34 : vector<128x128xf32>
    %cst_23 = arith.constant 2.000000e-01 : f32
    %36 = vector.broadcast %cst_23 : f32 to vector<128x128xf32>
    %37 = arith.mulf %36, %35 : vector<128x128xf32>
    %38 = arith.maximumf %35, %37 : vector<128x128xf32>
    %c3 = arith.constant 3 : index
    %c0_24 = arith.constant 0 : index
    %c0_25 = arith.constant 0 : index
    %39 = vector.load %arg2[%c3, %c0_24, %c0_25] : memref<6x128x128xf32, #tpu.memory_space<vmem>>, vector<1x128x128xf32>
    %40 = vector.shape_cast %39 : vector<1x128x128xf32> to vector<128x128xf32>
    %c3_26 = arith.constant 3 : index
    %c0_27 = arith.constant 0 : index
    %c0_28 = arith.constant 0 : index
    %41 = vector.load %arg3[%c3_26, %c0_27, %c0_28] : memref<6x1x128xf32, #tpu.memory_space<vmem>>, vector<1x1x128xf32>
    %42 = vector.shape_cast %41 : vector<1x1x128xf32> to vector<1x128xf32>
    %cst_29 = arith.constant dense<0.000000e+00> : vector<128x128xf32>
    %43 = tpu.matmul %38, %40, %cst_29 {dimension_numbers = #tpu.dot_dimension_numbers<[1], [0], [0], [1], [0, 0, 1, 1], [], []>} : vector<128x128xf32>, vector<128x128xf32>, vector<128x128xf32> -> vector<128x128xf32>
    %44 = vector.broadcast %42 : vector<1x128xf32> to vector<128x128xf32>
    %45 = arith.addf %43, %44 : vector<128x128xf32>
    %cst_30 = arith.constant 2.000000e-01 : f32
    %46 = vector.broadcast %cst_30 : f32 to vector<128x128xf32>
    %47 = arith.mulf %46, %45 : vector<128x128xf32>
    %48 = arith.maximumf %45, %47 : vector<128x128xf32>
    %c4 = arith.constant 4 : index
    %c0_31 = arith.constant 0 : index
    %c0_32 = arith.constant 0 : index
    %49 = vector.load %arg2[%c4, %c0_31, %c0_32] : memref<6x128x128xf32, #tpu.memory_space<vmem>>, vector<1x128x128xf32>
    %50 = vector.shape_cast %49 : vector<1x128x128xf32> to vector<128x128xf32>
    %c4_33 = arith.constant 4 : index
    %c0_34 = arith.constant 0 : index
    %c0_35 = arith.constant 0 : index
    %51 = vector.load %arg3[%c4_33, %c0_34, %c0_35] : memref<6x1x128xf32, #tpu.memory_space<vmem>>, vector<1x1x128xf32>
    %52 = vector.shape_cast %51 : vector<1x1x128xf32> to vector<1x128xf32>
    %cst_36 = arith.constant dense<0.000000e+00> : vector<128x128xf32>
    %53 = tpu.matmul %48, %50, %cst_36 {dimension_numbers = #tpu.dot_dimension_numbers<[1], [0], [0], [1], [0, 0, 1, 1], [], []>} : vector<128x128xf32>, vector<128x128xf32>, vector<128x128xf32> -> vector<128x128xf32>
    %54 = vector.broadcast %52 : vector<1x128xf32> to vector<128x128xf32>
    %55 = arith.addf %53, %54 : vector<128x128xf32>
    %cst_37 = arith.constant 2.000000e-01 : f32
    %56 = vector.broadcast %cst_37 : f32 to vector<128x128xf32>
    %57 = arith.mulf %56, %55 : vector<128x128xf32>
    %58 = arith.maximumf %55, %57 : vector<128x128xf32>
    %c5 = arith.constant 5 : index
    %c0_38 = arith.constant 0 : index
    %c0_39 = arith.constant 0 : index
    %59 = vector.load %arg2[%c5, %c0_38, %c0_39] : memref<6x128x128xf32, #tpu.memory_space<vmem>>, vector<1x128x128xf32>
    %60 = vector.shape_cast %59 : vector<1x128x128xf32> to vector<128x128xf32>
    %c5_40 = arith.constant 5 : index
    %c0_41 = arith.constant 0 : index
    %c0_42 = arith.constant 0 : index
    %61 = vector.load %arg3[%c5_40, %c0_41, %c0_42] : memref<6x1x128xf32, #tpu.memory_space<vmem>>, vector<1x1x128xf32>
    %62 = vector.shape_cast %61 : vector<1x1x128xf32> to vector<1x128xf32>
    %cst_43 = arith.constant dense<0.000000e+00> : vector<128x128xf32>
    %63 = tpu.matmul %58, %60, %cst_43 {dimension_numbers = #tpu.dot_dimension_numbers<[1], [0], [0], [1], [0, 0, 1, 1], [], []>} : vector<128x128xf32>, vector<128x128xf32>, vector<128x128xf32> -> vector<128x128xf32>
    %64 = vector.broadcast %62 : vector<1x128xf32> to vector<128x128xf32>
    %65 = arith.addf %63, %64 : vector<128x128xf32>
    %cst_44 = arith.constant 2.000000e-01 : f32
    %66 = vector.broadcast %cst_44 : f32 to vector<128x128xf32>
    %67 = arith.mulf %66, %65 : vector<128x128xf32>
    %68 = arith.maximumf %65, %67 : vector<128x128xf32>
    %c0_45 = arith.constant 0 : index
    %c0_46 = arith.constant 0 : index
    %69 = vector.load %arg4[%c0_45, %c0_46] : memref<128x128xf32, #tpu.memory_space<vmem>>, vector<128x128xf32>
    tpu.vector_store %arg4[%c0_45, %c0_46], %68 {strides = array<i32>} : memref<128x128xf32, #tpu.memory_space<vmem>>, vector<128x128xf32>,
    return
  }
  func.func @transform_0(%arg0: i32) -> (i32, i32) {
    %c0_i32 = arith.constant 0 : i32
    %c0_i32_0 = arith.constant 0 : i32
    return %arg0, %c0_i32 : i32, i32
  }
  func.func @transform_1(%arg0: i32) -> (i32, i32, i32) {
    %c0_i32 = arith.constant 0 : i32
    %c0_i32_0 = arith.constant 0 : i32
    %c0_i32_1 = arith.constant 0 : i32
    %c0_i32_2 = arith.constant 0 : i32
    return %c0_i32, %c0_i32_0, %c0_i32_1 : i32, i32, i32
  }
  func.func @transform_2(%arg0: i32) -> (i32, i32, i32) {
    %c0_i32 = arith.constant 0 : i32
    %c0_i32_0 = arith.constant 0 : i32
    %c0_i32_1 = arith.constant 0 : i32
    %c0_i32_2 = arith.constant 0 : i32
    return %c0_i32, %c0_i32_0, %c0_i32_1 : i32, i32, i32
  }
  func.func @transform_3(%arg0: i32) -> (i32, i32) {
    %c0_i32 = arith.constant 0 : i32
    %c0_i32_0 = arith.constant 0 : i32
    return %arg0, %c0_i32 : i32, i32
  }
}

</mosaic_0001>

<llo_original>
// kernel: tpu_custom_call.1
$region0: #{tpu_custom_call.1}
  #allocation0 [shape = 'u32[]', space=smem, size = 0x4, offset = 0x4, fixed_abs, tag = 'smem constant byte address 0x4 - core index']
  #allocation1 [shape = 'u32[144,128]{1,0:T(1,128)}', space=vmem, size = 0x12000, scoped, tag = 'internal scratch']
  %s0 = inlined_call_operand.hbm [shape: f32[256,128], index: 0, kind: input, shape index: {}]
  %s1 = inlined_call_operand.hbm [shape: f32[6,128,128], index: 1, kind: input, shape index: {}]
  %s2 = inlined_call_operand.hbm [shape: f32[6,1,128], index: 2, kind: input, shape index: {}]
  %s3 = inlined_call_operand.hbm [shape: f32[256,128], index: 3, kind: output, shape index: {}]
  %s4 = sld [smem:[#allocation0]]
  $region57: #{tpu_custom_call.1} parent=0
    _
  %s6 = ssub.s32 1, %s4
  %s7 = scalar_select 0, %s6, %s4
  $region1: #{tpu_custom_call.1} parent=0
    #allocation2 [shape = 'u8[131072]{0}', space=vmem, size = 0x20000, scoped, tag = 'input window, operand 0']
    #allocation3 [shape = 's32[2]{0}', space=sflag, size = 0x8, scoped, tag = 'scoped memory for tpu_custom_call.1']
    #allocation4 [shape = 's32[2]{0}', space=sflag, size = 0x8, scoped, tag = 'scoped memory for tpu_custom_call.1']
    #allocation5 [shape = 'u8[393216]{0}', space=vmem, size = 0x60000, scoped, tag = 'input window, operand 1, single buffered']
    #allocation6 [shape = 's32[1]{0}', space=sflag, size = 0x4, scoped, tag = 'scoped memory for tpu_custom_call.1']
    #allocation7 [shape = 'u8[3072]{0}', space=vmem, size = 0xc00, scoped, tag = 'input window, operand 2, single buffered']
    #allocation8 [shape = 'u8[131072]{0}', space=vmem, size = 0x20000, scoped, tag = 'output window, operand 0']
    %8 = vsyncpa [#allocation3], 0
    %s9 = scalar_lea.sflag [#allocation3], 1
    %10 = vsyncpa %s9, 0
    %11 = vsyncpa [#allocation6], 0
    %12 = vsyncpa [#allocation4], 0
    %s13 = scalar_lea.sflag [#allocation4], 1
    %14 = vsyncpa %s13, 0
    loop: start=0, step=1, limit=4
    $region2: #{tpu_custom_call.1} parent=1 // loop_pre_header
      _
    $region3: #{tpu_custom_call.1} parent=1 // loop_header
      %s16 = sphi 0, %s20
      %p17 = scmp.ge.s32.totalorder %s16, 4
      %s26 = sphi 0, %s28
      %s29 = sphi 0, %s26
      %s30 = sphi 0, %s29
      %s46 = sphi 0, %s30
      %s50 = sphi 0, %s50
      %s52 = sphi 0, %s50
      %s53 = sphi 0, %s52
      %s67 = sphi 0, %s53
      %s71 = sphi 0, %s71
      %s73 = sphi 0, %s71
      %s74 = sphi 0, %s73
      %s88 = sphi 0, %s74
      %s94 = sphi 0, %s96
      %s97 = sphi 0, %s94
      %s98 = sphi 0, %s97
      %s114 = sphi 0, %s98
    $region4: #{tpu_custom_call.1} parent=1 // loop_header_branch
      %19 = sbr.rel (%p17) target = $region8
    $region5: #{tpu_custom_call.1} parent=1 // loop_body
      %s21 = ssub.s32 %s16, 1
      %s22 = ssub.s32 %s16, 2
      %s23 = sadd.s32 %s16, 1
      %s24 = ssub.s32 %s16, %s23
      %p25 = scmp.eq.s32.totalorder %s24, 0
      %s27 = sadd.s32 %s26, 1
      %s28 = scalar_select %p25, %s26, %s27
      %p31 = pneg %p25
      %p32 = scmp.eq.s32.totalorder %s16, 1
      %p33 = por %p31, %p32
      %p34 = scmp.ne.s32.totalorder %s26, %s29
      %p35 = scmp.eq.s32.totalorder %s16, 0
      %p36 = por %p34, %p35
      %p37 = scmp.ne.s32.totalorder %s26, %s29
      %p38 = scmp.eq.s32.totalorder %s21, 1
      %p39 = por %p37, %p38
      %p40 = scmp.ne.s32.totalorder %s29, %s30
      %p41 = scmp.eq.s32.totalorder %s21, 0
      %p42 = por %p40, %p41
      %p43 = scmp.ne.s32.totalorder %s29, %s30
      %p44 = scmp.eq.s32.totalorder %s22, 1
      %p45 = por %p43, %p44
      %p47 = scmp.ne.s32.totalorder %s30, %s46
      %p48 = scmp.eq.s32.totalorder %s22, 0
      %p49 = por %p47, %p48
      %s51 = sadd.s32 %s50, 1
      %p54 = scmp.eq.s32.totalorder %s16, 1
      %p55 = scmp.ne.s32.totalorder %s50, %s52
      %p56 = scmp.eq.s32.totalorder %s16, 0
      %p57 = por %p55, %p56
      %p58 = scmp.ne.s32.totalorder %s50, %s52
      %p59 = scmp.eq.s32.totalorder %s21, 1
      %p60 = por %p58, %p59
      %p61 = scmp.ne.s32.totalorder %s52, %s53
      %p62 = scmp.eq.s32.totalorder %s21, 0
      %p63 = por %p61, %p62
      %p64 = scmp.ne.s32.totalorder %s52, %s53
      %p65 = scmp.eq.s32.totalorder %s22, 1
      %p66 = por %p64, %p65
      %p68 = scmp.ne.s32.totalorder %s53, %s67
      %p69 = scmp.eq.s32.totalorder %s22, 0
      %p70 = por %p68, %p69
      %s72 = sadd.s32 %s71, 1
      %p75 = scmp.eq.s32.totalorder %s16, 1
      %p76 = scmp.ne.s32.totalorder %s71, %s73
      %p77 = scmp.eq.s32.totalorder %s16, 0
      %p78 = por %p76, %p77
      %p79 = scmp.ne.s32.totalorder %s71, %s73
      %p80 = scmp.eq.s32.totalorder %s21, 1
      %p81 = por %p79, %p80
      %p82 = scmp.ne.s32.totalorder %s73, %s74
      %p83 = scmp.eq.s32.totalorder %s21, 0
      %p84 = por %p82, %p83
      %p85 = scmp.ne.s32.totalorder %s73, %s74
      %p86 = scmp.eq.s32.totalorder %s22, 1
      %p87 = por %p85, %p86
      %p89 = scmp.ne.s32.totalorder %s74, %s88
      %p90 = scmp.eq.s32.totalorder %s22, 0
      %p91 = por %p89, %p90
      %s92 = ssub.s32 %s16, %s23
      %p93 = scmp.eq.s32.totalorder %s92, 0
      %s95 = sadd.s32 %s94, 1
      %s96 = scalar_select %p93, %s94, %s95
      %p99 = pneg %p93
      %p100 = scmp.eq.s32.totalorder %s16, 1
      %p101 = por %p99, %p100
      %p102 = scmp.ne.s32.totalorder %s94, %s97
      %p103 = scmp.eq.s32.totalorder %s16, 0
      %p104 = por %p102, %p103
      %p105 = scmp.ne.s32.totalorder %s94, %s97
      %p106 = scmp.eq.s32.totalorder %s21, 1
      %p107 = por %p105, %p106
      %p108 = scmp.ne.s32.totalorder %s97, %s98
      %p109 = scmp.eq.s32.totalorder %s21, 0
      %p110 = por %p108, %p109
      %p111 = scmp.ne.s32.totalorder %s97, %s98
      %p112 = scmp.eq.s32.totalorder %s22, 1
      %p113 = por %p111, %p112
      %p115 = scmp.ne.s32.totalorder %s98, %s114
      %p116 = scmp.eq.s32.totalorder %s22, 0
      %p117 = por %p115, %p116
      %p118 = scmp.le.s32.totalorder 1, %s16
      %p119 = scmp.lt.s32.totalorder %s16, 3
      %p120 = pnand %p118, %p119
      %p121 = pneg %p120
      // Predicated region
      $region9: #{tpu_custom_call.1} parent=5 // pred_check
        _
      $region10: #{tpu_custom_call.1} parent=5 // pred_check_branch
        %123 = sbr.rel (%p120) target = $region12
      $region11: #{tpu_custom_call.1} parent=5 // pred_region
        %s124 = ssub.s32 %s16, 1
        // Predicated region
        $region13: #{tpu_custom_call.1} parent=11 // pred_check
          %p125 = pneg %p63
        $region14: #{tpu_custom_call.1} parent=11 // pred_check_branch
          %127 = sbr.rel (%p125) target = $region16
        $region15: #{tpu_custom_call.1} parent=11 // pred_region
          %s129 = ssub.s32 12288, 12288
          %130 = vsyncadd [#allocation6], %s129
          %s131 = sshll.u32 [#allocation5], 4
          %s132 = int_to_ptr.vmem [resolvable:$true] %s131
          %137 = dma.hbm_to_vmem [thread:$0]  %s1, 12288, %s132, [#allocation6], 128, 128, 8
        $region16: #{tpu_custom_call.1} parent=11 // pred_fallthru
          _
        // Predicated region
        $region17: #{tpu_custom_call.1} parent=11 // pred_check
          %p138 = pneg %p84
        $region18: #{tpu_custom_call.1} parent=11 // pred_check_branch
          %140 = sbr.rel (%p138) target = $region20
        $region19: #{tpu_custom_call.1} parent=11 // pred_region
          %s142 = ssub.s32 96, 96
          %143 = vsyncadd [#allocation6], %s142
          %s144 = sshll.u32 [#allocation7], 4
          %s145 = int_to_ptr.vmem [resolvable:$true] %s144
          %150 = dma.hbm_to_vmem [thread:$0]  %s2, 96, %s145, [#allocation6], 16, 16, 1
        $region20: #{tpu_custom_call.1} parent=11 // pred_fallthru
          _
      $region12: #{tpu_custom_call.1} parent=5 // pred_fallthru
        _
      %p151 = scmp.lt.s32.totalorder %s16, 2
      // Predicated region
      $region21: #{tpu_custom_call.1} parent=5 // pred_check
        %p152 = pneg %p151
      $region22: #{tpu_custom_call.1} parent=5 // pred_check_branch
        %154 = sbr.rel (%p152) target = $region24
      $region23: #{tpu_custom_call.1} parent=5 // pred_region
        // Predicated region
        $region25: #{tpu_custom_call.1} parent=23 // pred_check
          %p155 = pneg %p36
        $region26: #{tpu_custom_call.1} parent=23 // pred_check_branch
          %157 = sbr.rel (%p155) target = $region28
        $region27: #{tpu_custom_call.1} parent=23 // pred_region
          %s158 = sand.u32 %s26, 1
          %s159 = scalar_lea.sflag [#allocation3], %s158
          %s160 = sand.u32 %s26, 1
          %s161 = smul.addr %s160, 128
          %s162 = scalar_lea.vmem [#allocation2], %s161
          %s163 = smul.u32 16, %s16
          %s165 = ssub.s32 2048, 2048
          %166 = vsyncadd %s159, %s165
          %s167 = smul.addr %s163, 128
          %s168 = scalar_lea.hbm %s0, %s167
          %s169 = sshll.u32 %s162, 4
          %s170 = int_to_ptr.vmem [resolvable:$true] %s169
          %175 = dma.hbm_to_vmem [thread:$0]  %s168, 2048, %s170, %s159, 128, 128, 8
        $region28: #{tpu_custom_call.1} parent=23 // pred_fallthru
          _
      $region24: #{tpu_custom_call.1} parent=5 // pred_fallthru
        _
      %p176 = scmp.le.s32.totalorder 1, %s16
      %p177 = scmp.lt.s32.totalorder %s16, 3
      %p178 = pnand %p176, %p177
      %p179 = pneg %p178
      // Predicated region
      $region29: #{tpu_custom_call.1} parent=5 // pred_check
        _
      $region30: #{tpu_custom_call.1} parent=5 // pred_check_branch
        %181 = sbr.rel (%p178) target = $region32
      $region31: #{tpu_custom_call.1} parent=5 // pred_region
        %s182 = ssub.s32 %s16, 1
        %s183 = sand.u32 %s29, 1
        %s184 = scalar_lea.sflag [#allocation3], %s183
        %s185 = sand.u32 %s29, 1
        %s186 = smul.addr %s185, 128
        %s187 = scalar_lea.vmem [#allocation2], %s186
        // Predicated region
        $region33: #{tpu_custom_call.1} parent=31 // pred_check
          %p188 = pneg %p42
        $region34: #{tpu_custom_call.1} parent=31 // pred_check_branch
          %190 = sbr.rel (%p188) target = $region36
        $region35: #{tpu_custom_call.1} parent=31 // pred_region
          %191 = dma.done %s184, 2048
        $region36: #{tpu_custom_call.1} parent=31 // pred_fallthru
          _
        // Predicated region
        $region37: #{tpu_custom_call.1} parent=31 // pred_check
          %p192 = pneg %p63
        $region38: #{tpu_custom_call.1} parent=31 // pred_check_branch
          %194 = sbr.rel (%p192) target = $region40
        $region39: #{tpu_custom_call.1} parent=31 // pred_region
          %195 = dma.done [#allocation6], 12288
        $region40: #{tpu_custom_call.1} parent=31 // pred_fallthru
          _
        // Predicated region
        $region41: #{tpu_custom_call.1} parent=31 // pred_check
          %p196 = pneg %p84
        $region42: #{tpu_custom_call.1} parent=31 // pred_check_branch
          %198 = sbr.rel (%p196) target = $region44
        $region43: #{tpu_custom_call.1} parent=31 // pred_region
          %199 = dma.done [#allocation6], 96
        $region44: #{tpu_custom_call.1} parent=31 // pred_fallthru
          _
        %s200 = sand.u32 %s29, 1
        %s201 = scalar_lea.sflag [#allocation3], %s200
        %s202 = sand.u32 %s29, 1
        %s203 = smul.addr %s202, 128
        %s204 = scalar_lea.vmem [#allocation2], %s203
        %p205 = pneg %p42
        %p206 = pneg %p39
        %p207 = pneg %p63
        %p208 = pneg %p60
        %p209 = pneg %p84
        %p210 = pneg %p81
        %p211 = pneg %p110
        %p212 = pneg %p107
        %s213 = sand.u32 %s97, 1
        %s214 = scalar_lea.sflag [#allocation4], %s213
        %s215 = sand.u32 %s97, 1
        %s216 = smul.addr %s215, 128
        %s217 = scalar_lea.vmem [#allocation8], %s216
        %s218 = smul.u32 16, %s21
        %s219 = smul.u32 16, %s21
        %v220 = vld [vmem:[%s187] sm:$0xff]
        %v221 = vld [vmem:[%s187 + $0x8] sm:$0xff]
        %v222 = vld [vmem:[%s187 + $0x10] sm:$0xff]
        %v223 = vld [vmem:[%s187 + $0x18] sm:$0xff]
        %v224 = vld [vmem:[%s187 + $0x20] sm:$0xff]
        %v225 = vld [vmem:[%s187 + $0x28] sm:$0xff]
        %v226 = vld [vmem:[%s187 + $0x30] sm:$0xff]
        %v227 = vld [vmem:[%s187 + $0x38] sm:$0xff]
        %v228 = vld [vmem:[%s187 + $0x40] sm:$0xff]
        %v229 = vld [vmem:[%s187 + $0x48] sm:$0xff]
        %v230 = vld [vmem:[%s187 + $0x50] sm:$0xff]
        %v231 = vld [vmem:[%s187 + $0x58] sm:$0xff]
        %v232 = vld [vmem:[%s187 + $0x60] sm:$0xff]
        %v233 = vld [vmem:[%s187 + $0x68] sm:$0xff]
        %v234 = vld [vmem:[%s187 + $0x70] sm:$0xff]
        %v235 = vld [vmem:[%s187 + $0x78] sm:$0xff]
        %v236 = vmul.f32 %v220, %v220
        %v237 = vmul.f32 %v221, %v221
        %v238 = vmul.f32 %v222, %v222
        %v239 = vmul.f32 %v223, %v223
        %v240 = vmul.f32 %v224, %v224
        %v241 = vmul.f32 %v225, %v225
        %v242 = vmul.f32 %v226, %v226
        %v243 = vmul.f32 %v227, %v227
        %v244 = vmul.f32 %v228, %v228
        %v245 = vmul.f32 %v229, %v229
        %v246 = vmul.f32 %v230, %v230
        %v247 = vmul.f32 %v231, %v231
        %v248 = vmul.f32 %v232, %v232
        %v249 = vmul.f32 %v233, %v233
        %v250 = vmul.f32 %v234, %v234
        %v251 = vmul.f32 %v235, %v235
        %252 = vadd.xlane.f32.xlu0 %v236
        %v253 = vpop.xlane.xlu0 %252
        %254 = vadd.xlane.f32.xlu0 %v237
        %v255 = vpop.xlane.xlu0 %254
        %256 = vadd.xlane.f32.xlu0 %v238
        %v257 = vpop.xlane.xlu0 %256
        %258 = vadd.xlane.f32.xlu0 %v239
        %v259 = vpop.xlane.xlu0 %258
        %260 = vadd.xlane.f32.xlu0 %v240
        %v261 = vpop.xlane.xlu0 %260
        %262 = vadd.xlane.f32.xlu0 %v241
        %v263 = vpop.xlane.xlu0 %262
        %264 = vadd.xlane.f32.xlu0 %v242
        %v265 = vpop.xlane.xlu0 %264
        %266 = vadd.xlane.f32.xlu0 %v243
        %v267 = vpop.xlane.xlu0 %266
        %268 = vadd.xlane.f32.xlu0 %v244
        %v269 = vpop.xlane.xlu0 %268
        %270 = vadd.xlane.f32.xlu0 %v245
        %v271 = vpop.xlane.xlu0 %270
        %272 = vadd.xlane.f32.xlu0 %v246
        %v273 = vpop.xlane.xlu0 %272
        %274 = vadd.xlane.f32.xlu0 %v247
        %v275 = vpop.xlane.xlu0 %274
        %276 = vadd.xlane.f32.xlu0 %v248
        %v277 = vpop.xlane.xlu0 %276
        %278 = vadd.xlane.f32.xlu0 %v249
        %v279 = vpop.xlane.xlu0 %278
        %280 = vadd.xlane.f32.xlu0 %v250
        %v281 = vpop.xlane.xlu0 %280
        %282 = vadd.xlane.f32.xlu0 %v251
        %v283 = vpop.xlane.xlu0 %282
        %v284 = vmax.f32 %v253, 1e-24
        %v285 = vmax.f32 %v255, 1e-24
        %v286 = vmax.f32 %v257, 1e-24
        %v287 = vmax.f32 %v259, 1e-24
        %v288 = vmax.f32 %v261, 1e-24
        %v289 = vmax.f32 %v263, 1e-24
        %v290 = vmax.f32 %v265, 1e-24
        %v291 = vmax.f32 %v267, 1e-24
        %v292 = vmax.f32 %v269, 1e-24
        %v293 = vmax.f32 %v271, 1e-24
        %v294 = vmax.f32 %v273, 1e-24
        %v295 = vmax.f32 %v275, 1e-24
        %v296 = vmax.f32 %v277, 1e-24
        %v297 = vmax.f32 %v279, 1e-24
        %v298 = vmax.f32 %v281, 1e-24
        %v299 = vmax.f32 %v283, 1e-24
        %v300 = vrsqrt.pop %v284
        %v301 = vrsqrt.pop %v285
        %v302 = vrsqrt.pop %v286
        %v303 = vrsqrt.pop %v287
        %v304 = vrsqrt.pop %v288
        %v305 = vrsqrt.pop %v289
        %v306 = vrsqrt.pop %v290
        %v307 = vrsqrt.pop %v291
        %v308 = vrsqrt.pop %v292
        %v309 = vrsqrt.pop %v293
        %v310 = vrsqrt.pop %v294
        %v311 = vrsqrt.pop %v295
        %v312 = vrsqrt.pop %v296
        %v313 = vrsqrt.pop %v297
        %v314 = vrsqrt.pop %v298
        %v315 = vrsqrt.pop %v299
        %v316 = vmul.f32 %v220, %v300
        %v317 = vmul.f32 %v221, %v301
        %v318 = vmul.f32 %v222, %v302
        %v319 = vmul.f32 %v223, %v303
        %v320 = vmul.f32 %v224, %v304
        %v321 = vmul.f32 %v225, %v305
        %v322 = vmul.f32 %v226, %v306
        %v323 = vmul.f32 %v227, %v307
        %v324 = vmul.f32 %v228, %v308
        %v325 = vmul.f32 %v229, %v309
        %v326 = vmul.f32 %v230, %v310
        %v327 = vmul.f32 %v231, %v311
        %v328 = vmul.f32 %v232, %v312
        %v329 = vmul.f32 %v233, %v313
        %v330 = vmul.f32 %v234, %v314
        %v331 = vmul.f32 %v235, %v315
        %v332 = vld [vmem:[#allocation5] sm:$0xff]
        %v333 = vld [vmem:[#allocation5 + $0x8] sm:$0xff]
        %v334 = vld [vmem:[#allocation5 + $0x10] sm:$0xff]
        %v335 = vld [vmem:[#allocation5 + $0x18] sm:$0xff]
        %v336 = vld [vmem:[#allocation5 + $0x20] sm:$0xff]
        %v337 = vld [vmem:[#allocation5 + $0x28] sm:$0xff]
        %v338 = vld [vmem:[#allocation5 + $0x30] sm:$0xff]
        %v339 = vld [vmem:[#allocation5 + $0x38] sm:$0xff]
        %v340 = vld [vmem:[#allocation5 + $0x40] sm:$0xff]
        %v341 = vld [vmem:[#allocation5 + $0x48] sm:$0xff]
        %v342 = vld [vmem:[#allocation5 + $0x50] sm:$0xff]
        %v343 = vld [vmem:[#allocation5 + $0x58] sm:$0xff]
        %v344 = vld [vmem:[#allocation5 + $0x60] sm:$0xff]
        %v345 = vld [vmem:[#allocation5 + $0x68] sm:$0xff]
        %v346 = vld [vmem:[#allocation5 + $0x70] sm:$0xff]
        %v347 = vld [vmem:[#allocation5 + $0x78] sm:$0xff]
        %v348 = vld [vmem:[#allocation7] sm:$0x1]
        %v350 = vlaneseq
        %v351 = vshrl.u32 %v350, 7
        %v352 = vsub.s32 0, %v351
        %v353 = vrot.slane %v348, %v352
        %355 = vmatprep.subr.mxu0 0.0
        %356 = vmatpush1.msra.mxu0 %v347
        %357 = vmatprep.subr.mxu0 0.0
        %358 = vmatpush1.msra.mxu0 %v346
        %359 = vmatprep.subr.mxu0 0.0
        %360 = vmatpush1.msra.mxu0 %v345
        %361 = vmatprep.subr.mxu0 0.0
        %362 = vmatpush1.msra.mxu0 %v344
        %363 = vmatprep.subr.mxu0 0.0
        %364 = vmatpush1.msra.mxu0 %v343
        %365 = vmatprep.subr.mxu0 0.0
        %366 = vmatpush1.msra.mxu0 %v342
        %367 = vmatprep.subr.mxu0 0.0
        %368 = vmatpush1.msra.mxu0 %v341
        %369 = vmatprep.subr.mxu0 0.0
        %370 = vmatpush1.msra.mxu0 %v340
        %371 = vmatprep.subr.mxu0 0.0
        %372 = vmatpush1.msra.mxu0 %v339
        %373 = vmatprep.subr.mxu0 0.0
        %374 = vmatpush1.msra.mxu0 %v338
        %375 = vmatprep.subr.mxu0 0.0
        %376 = vmatpush1.msra.mxu0 %v337
        %377 = vmatprep.subr.mxu0 0.0
        %378 = vmatpush1.msra.mxu0 %v336
        %379 = vmatprep.subr.mxu0 0.0
        %380 = vmatpush1.msra.mxu0 %v335
        %381 = vmatprep.subr.mxu0 0.0
        %382 = vmatpush1.msra.mxu0 %v334
        %383 = vmatprep.subr.mxu0 0.0
        %384 = vmatpush1.msra.mxu0 %v333
        %385 = vmatprep.subr.mxu0 0.0
        %386 = vmatpush1.msra.mxu0 %v332
        %387 = vmatprep.subr.mxu0 0.0
        %388 = vmatpush2.msra.mxu0 0.0
        %389 = vmatprep.subr.mxu0 0.0
        %390 = vmatpush2.msra.mxu0 0.0
        %391 = vmatprep.subr.mxu0 0.0
        %392 = vmatpush2.msra.mxu0 0.0
        %393 = vmatprep.subr.mxu0 0.0
        %394 = vmatpush2.msra.mxu0 0.0
        %395 = vmatprep.subr.mxu0 0.0
        %396 = vmatpush2.msra.mxu0 0.0
        %397 = vmatprep.subr.mxu0 0.0
        %398 = vmatpush2.msra.mxu0 0.0
        %399 = vmatprep.subr.mxu0 0.0
        %400 = vmatpush2.msra.mxu0 0.0
        %401 = vmatprep.subr.mxu0 0.0
        %402 = vmatpush2.msra.mxu0 0.0
        %403 = vmatprep.subr.mxu0 0.0
        %404 = vmatpush2.msra.mxu0 0.0
        %405 = vmatprep.subr.mxu0 0.0
        %406 = vmatpush2.msra.mxu0 0.0
        %407 = vmatprep.subr.mxu0 0.0
        %408 = vmatpush2.msra.mxu0 0.0
        %409 = vmatprep.subr.mxu0 0.0
        %410 = vmatpush2.msra.mxu0 0.0
        %411 = vmatprep.subr.mxu0 0.0
        %412 = vmatpush2.msra.mxu0 0.0
        %413 = vmatprep.subr.mxu0 0.0
        %414 = vmatpush2.msra.mxu0 0.0
        %415 = vmatprep.subr.mxu0 0.0
        %416 = vmatpush2.msra.mxu0 0.0
        %417 = vmatprep.subr.mxu0 0.0
        %418 = vmatpush2.msra.mxu0 0.0
        %419 = vmatprep.mubr.f32.mxu0 0.0
        %420 = vmatmul.mubr.f32.gmra.mxu0 %v316
        %v421 = vpop.f32.mrf.mxu0
        %v422 = vadd.f32 %v353, %v421
        %v423 = vpop.f32.mrf.mxu0
        %424 = vmatprep.mubr.f32.mxu0 0.0
        %425 = vmatmul.mubr.f32.gmra.mxu0 %v317
        %v426 = vpop.f32.mrf.mxu0
        %v427 = vadd.f32 %v353, %v426
        %v428 = vpop.f32.mrf.mxu0
        %429 = vmatprep.mubr.f32.mxu0 0.0
        %430 = vmatmul.mubr.f32.gmra.mxu0 %v318
        %v431 = vpop.f32.mrf.mxu0
        %v432 = vadd.f32 %v353, %v431
        %v433 = vpop.f32.mrf.mxu0
        %434 = vmatprep.mubr.f32.mxu0 0.0
        %435 = vmatmul.mubr.f32.gmra.mxu0 %v319
        %v436 = vpop.f32.mrf.mxu0
        %v437 = vadd.f32 %v353, %v436
        %v438 = vpop.f32.mrf.mxu0
        %439 = vmatprep.mubr.f32.mxu0 0.0
        %440 = vmatmul.mubr.f32.gmra.mxu0 %v320
        %v441 = vpop.f32.mrf.mxu0
        %v442 = vadd.f32 %v353, %v441
        %v443 = vpop.f32.mrf.mxu0
        %444 = vmatprep.mubr.f32.mxu0 0.0
        %445 = vmatmul.mubr.f32.gmra.mxu0 %v321
        %v446 = vpop.f32.mrf.mxu0
        %v447 = vadd.f32 %v353, %v446
        %v448 = vpop.f32.mrf.mxu0
        %449 = vmatprep.mubr.f32.mxu0 0.0
        %450 = vmatmul.mubr.f32.gmra.mxu0 %v322
        %v451 = vpop.f32.mrf.mxu0
        %v452 = vadd.f32 %v353, %v451
        %v453 = vpop.f32.mrf.mxu0
        %454 = vmatprep.mubr.f32.mxu0 0.0
        %455 = vmatmul.mubr.f32.gmra.mxu0 %v323
        %v456 = vpop.f32.mrf.mxu0
        %v457 = vadd.f32 %v353, %v456
        %v458 = vpop.f32.mrf.mxu0
        %459 = vmatprep.mubr.f32.mxu0 0.0
        %460 = vmatmul.mubr.f32.gmra.mxu0 %v324
        %v461 = vpop.f32.mrf.mxu0
        %v462 = vadd.f32 %v353, %v461
        %v463 = vpop.f32.mrf.mxu0
        %464 = vmatprep.mubr.f32.mxu0 0.0
        %465 = vmatmul.mubr.f32.gmra.mxu0 %v325
        %v466 = vpop.f32.mrf.mxu0
        %v467 = vadd.f32 %v353, %v466
        %v468 = vpop.f32.mrf.mxu0
        %469 = vmatprep.mubr.f32.mxu0 0.0
        %470 = vmatmul.mubr.f32.gmra.mxu0 %v326
        %v471 = vpop.f32.mrf.mxu0
        %v472 = vadd.f32 %v353, %v471
        %v473 = vpop.f32.mrf.mxu0
        %474 = vmatprep.mubr.f32.mxu0 0.0
        %475 = vmatmul.mubr.f32.gmra.mxu0 %v327
        %v476 = vpop.f32.mrf.mxu0
        %v477 = vadd.f32 %v353, %v476
        %v478 = vpop.f32.mrf.mxu0
        %479 = vmatprep.mubr.f32.mxu0 0.0
        %480 = vmatmul.mubr.f32.gmra.mxu0 %v328
        %v481 = vpop.f32.mrf.mxu0
        %v482 = vadd.f32 %v353, %v481
        %v483 = vpop.f32.mrf.mxu0
        %484 = vmatprep.mubr.f32.mxu0 0.0
        %485 = vmatmul.mubr.f32.gmra.mxu0 %v329
        %v486 = vpop.f32.mrf.mxu0
        %v487 = vadd.f32 %v353, %v486
        %v488 = vpop.f32.mrf.mxu0
        %489 = vmatprep.mubr.f32.mxu0 0.0
        %490 = vmatmul.mubr.f32.gmra.mxu0 %v330
        %v491 = vpop.f32.mrf.mxu0
        %v492 = vadd.f32 %v353, %v491
        %v493 = vpop.f32.mrf.mxu0
        %494 = vmatprep.mubr.f32.mxu0 0.0
        %495 = vmatmul.mubr.f32.gmra.mxu0 %v331
        %v496 = vpop.f32.mrf.mxu0
        %v497 = vadd.f32 %v353, %v496
        %v498 = vpop.f32.mrf.mxu0
        %499 = vdwg.mxu0
        %v500 = vmul.f32 %v422, 0.2
        %v501 = vmul.f32 %v427, 0.2
        %v502 = vmul.f32 %v432, 0.2
        %v503 = vmul.f32 %v437, 0.2
        %v504 = vmul.f32 %v442, 0.2
        %v505 = vmul.f32 %v447, 0.2
        %v506 = vmul.f32 %v452, 0.2
        %v507 = vmul.f32 %v457, 0.2
        %v508 = vmul.f32 %v462, 0.2
        %v509 = vmul.f32 %v467, 0.2
        %v510 = vmul.f32 %v472, 0.2
        %v511 = vmul.f32 %v477, 0.2
        %v512 = vmul.f32 %v482, 0.2
        %v513 = vmul.f32 %v487, 0.2
        %v514 = vmul.f32 %v492, 0.2
        %v515 = vmul.f32 %v497, 0.2
        %v516 = vmax.f32 %v422, %v500
        %v517 = vmax.f32 %v427, %v501
        %v518 = vmax.f32 %v432, %v502
        %v519 = vmax.f32 %v437, %v503
        %v520 = vmax.f32 %v442, %v504
        %v521 = vmax.f32 %v447, %v505
        %v522 = vmax.f32 %v452, %v506
        %v523 = vmax.f32 %v457, %v507
        %v524 = vmax.f32 %v462, %v508
        %v525 = vmax.f32 %v467, %v509
        %v526 = vmax.f32 %v472, %v510
        %v527 = vmax.f32 %v477, %v511
        %v528 = vmax.f32 %v482, %v512
        %v529 = vmax.f32 %v487, %v513
        %v530 = vmax.f32 %v492, %v514
        %v531 = vmax.f32 %v497, %v515
        %s532 = scalar_lea.vmem [#allocation5], 128
        %v533 = vld [vmem:[%s532] sm:$0xff]
        %v534 = vld [vmem:[%s532 + $0x8] sm:$0xff]
        %v535 = vld [vmem:[%s532 + $0x10] sm:$0xff]
        %v536 = vld [vmem:[%s532 + $0x18] sm:$0xff]
        %v537 = vld [vmem:[%s532 + $0x20] sm:$0xff]
        %v538 = vld [vmem:[%s532 + $0x28] sm:$0xff]
        %v539 = vld [vmem:[%s532 + $0x30] sm:$0xff]
        %v540 = vld [vmem:[%s532 + $0x38] sm:$0xff]
        %v541 = vld [vmem:[%s532 + $0x40] sm:$0xff]
        %v542 = vld [vmem:[%s532 + $0x48] sm:$0xff]
        %v543 = vld [vmem:[%s532 + $0x50] sm:$0xff]
        %v544 = vld [vmem:[%s532 + $0x58] sm:$0xff]
        %v545 = vld [vmem:[%s532 + $0x60] sm:$0xff]
        %v546 = vld [vmem:[%s532 + $0x68] sm:$0xff]
        %v547 = vld [vmem:[%s532 + $0x70] sm:$0xff]
        %v548 = vld [vmem:[%s532 + $0x78] sm:$0xff]
        %s549 = scalar_lea.vmem [#allocation7], 1
        %v550 = vld [vmem:[%s549] sm:$0x1]
        %v552 = vlaneseq
        %v553 = vshrl.u32 %v552, 7
        %v554 = vsub.s32 0, %v553
        %v555 = vrot.slane %v550, %v554
        %557 = vmatprep.subr.mxu0 0.0
        %558 = vmatpush1.msra.mxu0 %v548
        %559 = vmatprep.subr.mxu0 0.0
        %560 = vmatpush1.msra.mxu0 %v547
        %561 = vmatprep.subr.mxu0 0.0
        %562 = vmatpush1.msra.mxu0 %v546
        %563 = vmatprep.subr.mxu0 0.0
        %564 = vmatpush1.msra.mxu0 %v545
        %565 = vmatprep.subr.mxu0 0.0
        %566 = vmatpush1.msra.mxu0 %v544
        %567 = vmatprep.subr.mxu0 0.0
        %568 = vmatpush1.msra.mxu0 %v543
        %569 = vmatprep.subr.mxu0 0.0
        %570 = vmatpush1.msra.mxu0 %v542
        %571 = vmatprep.subr.mxu0 0.0
        %572 = vmatpush1.msra.mxu0 %v541
        %573 = vmatprep.subr.mxu0 0.0
        %574 = vmatpush1.msra.mxu0 %v540
        %575 = vmatprep.subr.mxu0 0.0
        %576 = vmatpush1.msra.mxu0 %v539
        %577 = vmatprep.subr.mxu0 0.0
        %578 = vmatpush1.msra.mxu0 %v538
        %579 = vmatprep.subr.mxu0 0.0
        %580 = vmatpush1.msra.mxu0 %v537
        %581 = vmatprep.subr.mxu0 0.0
        %582 = vmatpush1.msra.mxu0 %v536
        %583 = vmatprep.subr.mxu0 0.0
        %584 = vmatpush1.msra.mxu0 %v535
        %585 = vmatprep.subr.mxu0 0.0
        %586 = vmatpush1.msra.mxu0 %v534
        %587 = vmatprep.subr.mxu0 0.0
        %588 = vmatpush1.msra.mxu0 %v533
        %589 = vmatprep.subr.mxu0 0.0
        %590 = vmatpush2.msra.mxu0 0.0
        %591 = vmatprep.subr.mxu0 0.0
        %592 = vmatpush2.msra.mxu0 0.0
        %593 = vmatprep.subr.mxu0 0.0
        %594 = vmatpush2.msra.mxu0 0.0
        %595 = vmatprep.subr.mxu0 0.0
        %596 = vmatpush2.msra.mxu0 0.0
        %597 = vmatprep.subr.mxu0 0.0
        %598 = vmatpush2.msra.mxu0 0.0
        %599 = vmatprep.subr.mxu0 0.0
        %600 = vmatpush2.msra.mxu0 0.0
        %601 = vmatprep.subr.mxu0 0.0
        %602 = vmatpush2.msra.mxu0 0.0
        %603 = vmatprep.subr.mxu0 0.0
        %604 = vmatpush2.msra.mxu0 0.0
        %605 = vmatprep.subr.mxu0 0.0
        %606 = vmatpush2.msra.mxu0 0.0
        %607 = vmatprep.subr.mxu0 0.0
        %608 = vmatpush2.msra.mxu0 0.0
        %609 = vmatprep.subr.mxu0 0.0
        %610 = vmatpush2.msra.mxu0 0.0
        %611 = vmatprep.subr.mxu0 0.0
        %612 = vmatpush2.msra.mxu0 0.0
        %613 = vmatprep.subr.mxu0 0.0
        %614 = vmatpush2.msra.mxu0 0.0
        %615 = vmatprep.subr.mxu0 0.0
        %616 = vmatpush2.msra.mxu0 0.0
        %617 = vmatprep.subr.mxu0 0.0
        %618 = vmatpush2.msra.mxu0 0.0
        %619 = vmatprep.subr.mxu0 0.0
        %620 = vmatpush2.msra.mxu0 0.0
        %621 = vmatprep.mubr.f32.mxu0 0.0
        %622 = vmatmul.mubr.f32.gmra.mxu0 %v516
        %v623 = vpop.f32.mrf.mxu0
        %v624 = vadd.f32 %v555, %v623
        %v625 = vpop.f32.mrf.mxu0
        %626 = vmatprep.mubr.f32.mxu0 0.0
        %627 = vmatmul.mubr.f32.gmra.mxu0 %v517
        %v628 = vpop.f32.mrf.mxu0
        %v629 = vadd.f32 %v555, %v628
        %v630 = vpop.f32.mrf.mxu0
        %631 = vmatprep.mubr.f32.mxu0 0.0
        %632 = vmatmul.mubr.f32.gmra.mxu0 %v518
        %v633 = vpop.f32.mrf.mxu0
        %v634 = vadd.f32 %v555, %v633
        %v635 = vpop.f32.mrf.mxu0
        %636 = vmatprep.mubr.f32.mxu0 0.0
        %637 = vmatmul.mubr.f32.gmra.mxu0 %v519
        %v638 = vpop.f32.mrf.mxu0
        %v639 = vadd.f32 %v555, %v638
        %v640 = vpop.f32.mrf.mxu0
        %641 = vmatprep.mubr.f32.mxu0 0.0
        %642 = vmatmul.mubr.f32.gmra.mxu0 %v520
        %v643 = vpop.f32.mrf.mxu0
        %v644 = vadd.f32 %v555, %v643
        %v645 = vpop.f32.mrf.mxu0
        %646 = vmatprep.mubr.f32.mxu0 0.0
        %647 = vmatmul.mubr.f32.gmra.mxu0 %v521
        %v648 = vpop.f32.mrf.mxu0
        %v649 = vadd.f32 %v555, %v648
        %v650 = vpop.f32.mrf.mxu0
        %651 = vmatprep.mubr.f32.mxu0 0.0
        %652 = vmatmul.mubr.f32.gmra.mxu0 %v522
        %v653 = vpop.f32.mrf.mxu0
        %v654 = vadd.f32 %v555, %v653
        %v655 = vpop.f32.mrf.mxu0
        %656 = vmatprep.mubr.f32.mxu0 0.0
        %657 = vmatmul.mubr.f32.gmra.mxu0 %v523
        %v658 = vpop.f32.mrf.mxu0
        %v659 = vadd.f32 %v555, %v658
        %v660 = vpop.f32.mrf.mxu0
        %661 = vmatprep.mubr.f32.mxu0 0.0
        %662 = vmatmul.mubr.f32.gmra.mxu0 %v524
        %v663 = vpop.f32.mrf.mxu0
        %v664 = vadd.f32 %v555, %v663
        %v665 = vpop.f32.mrf.mxu0
        %666 = vmatprep.mubr.f32.mxu0 0.0
        %667 = vmatmul.mubr.f32.gmra.mxu0 %v525
        %v668 = vpop.f32.mrf.mxu0
        %v669 = vadd.f32 %v555, %v668
        %v670 = vpop.f32.mrf.mxu0
        %671 = vmatprep.mubr.f32.mxu0 0.0
        %672 = vmatmul.mubr.f32.gmra.mxu0 %v526
        %v673 = vpop.f32.mrf.mxu0
        %v674 = vadd.f32 %v555, %v673
        %v675 = vpop.f32.mrf.mxu0
        %676 = vmatprep.mubr.f32.mxu0 0.0
        %677 = vmatmul.mubr.f32.gmra.mxu0 %v527
        %v678 = vpop.f32.mrf.mxu0
        %v679 = vadd.f32 %v555, %v678
        %v680 = vpop.f32.mrf.mxu0
        %681 = vmatprep.mubr.f32.mxu0 0.0
        %682 = vmatmul.mubr.f32.gmra.mxu0 %v528
        %v683 = vpop.f32.mrf.mxu0
        %v684 = vadd.f32 %v555, %v683
        %v685 = vpop.f32.mrf.mxu0
        %686 = vmatprep.mubr.f32.mxu0 0.0
        %687 = vmatmul.mubr.f32.gmra.mxu0 %v529
        %v688 = vpop.f32.mrf.mxu0
        %v689 = vadd.f32 %v555, %v688
        %v690 = vpop.f32.mrf.mxu0
        %691 = vmatprep.mubr.f32.mxu0 0.0
        %692 = vmatmul.mubr.f32.gmra.mxu0 %v530
        %v693 = vpop.f32.mrf.mxu0
        %v694 = vadd.f32 %v555, %v693
        %v695 = vpop.f32.mrf.mxu0
        %696 = vmatprep.mubr.f32.mxu0 0.0
        %697 = vmatmul.mubr.f32.gmra.mxu0 %v531
        %v698 = vpop.f32.mrf.mxu0
        %v699 = vadd.f32 %v555, %v698
        %v700 = vpop.f32.mrf.mxu0
        %701 = vdwg.mxu0
        %v702 = vmul.f32 %v624, 0.2
        %v703 = vmul.f32 %v629, 0.2
        %v704 = vmul.f32 %v634, 0.2
        %v705 = vmul.f32 %v639, 0.2
        %v706 = vmul.f32 %v644, 0.2
        %v707 = vmul.f32 %v649, 0.2
        %v708 = vmul.f32 %v654, 0.2
        %v709 = vmul.f32 %v659, 0.2
        %v710 = vmul.f32 %v664, 0.2
        %v711 = vmul.f32 %v669, 0.2
        %v712 = vmul.f32 %v674, 0.2
        %v713 = vmul.f32 %v679, 0.2
        %v714 = vmul.f32 %v684, 0.2
        %v715 = vmul.f32 %v689, 0.2
        %v716 = vmul.f32 %v694, 0.2
        %v717 = vmul.f32 %v699, 0.2
        %v718 = vmax.f32 %v624, %v702
        %v719 = vmax.f32 %v629, %v703
        %v720 = vmax.f32 %v634, %v704
        %v721 = vmax.f32 %v639, %v705
        %v722 = vmax.f32 %v644, %v706
        %v723 = vmax.f32 %v649, %v707
        %v724 = vmax.f32 %v654, %v708
        %v725 = vmax.f32 %v659, %v709
        %v726 = vmax.f32 %v664, %v710
        %v727 = vmax.f32 %v669, %v711
        %v728 = vmax.f32 %v674, %v712
        %v729 = vmax.f32 %v679, %v713
        %v730 = vmax.f32 %v684, %v714
        %v731 = vmax.f32 %v689, %v715
        %v732 = vmax.f32 %v694, %v716
        %v733 = vmax.f32 %v699, %v717
        %s734 = scalar_lea.vmem [#allocation5], 256
        %v735 = vld [vmem:[%s734] sm:$0xff]
        %v736 = vld [vmem:[%s734 + $0x8] sm:$0xff]
        %v737 = vld [vmem:[%s734 + $0x10] sm:$0xff]
        %v738 = vld [vmem:[%s734 + $0x18] sm:$0xff]
        %v739 = vld [vmem:[%s734 + $0x20] sm:$0xff]
        %v740 = vld [vmem:[%s734 + $0x28] sm:$0xff]
        %v741 = vld [vmem:[%s734 + $0x30] sm:$0xff]
        %v742 = vld [vmem:[%s734 + $0x38] sm:$0xff]
        %v743 = vld [vmem:[%s734 + $0x40] sm:$0xff]
        %v744 = vld [vmem:[%s734 + $0x48] sm:$0xff]
        %v745 = vld [vmem:[%s734 + $0x50] sm:$0xff]
        %v746 = vld [vmem:[%s734 + $0x58] sm:$0xff]
        %v747 = vld [vmem:[%s734 + $0x60] sm:$0xff]
        %v748 = vld [vmem:[%s734 + $0x68] sm:$0xff]
        %v749 = vld [vmem:[%s734 + $0x70] sm:$0xff]
        %v750 = vld [vmem:[%s734 + $0x78] sm:$0xff]
        %s751 = scalar_lea.vmem [#allocation7], 2
        %v752 = vld [vmem:[%s751] sm:$0x1]
        %v754 = vlaneseq
        %v755 = vshrl.u32 %v754, 7
        %v756 = vsub.s32 0, %v755
        %v757 = vrot.slane %v752, %v756
        %759 = vmatprep.subr.mxu0 0.0
        %760 = vmatpush1.msra.mxu0 %v750
        %761 = vmatprep.subr.mxu0 0.0
        %762 = vmatpush1.msra.mxu0 %v749
        %763 = vmatprep.subr.mxu0 0.0
        %764 = vmatpush1.msra.mxu0 %v748
        %765 = vmatprep.subr.mxu0 0.0
        %766 = vmatpush1.msra.mxu0 %v747
        %767 = vmatprep.subr.mxu0 0.0
        %768 = vmatpush1.msra.mxu0 %v746
        %769 = vmatprep.subr.mxu0 0.0
        %770 = vmatpush1.msra.mxu0 %v745
        %771 = vmatprep.subr.mxu0 0.0
        %772 = vmatpush1.msra.mxu0 %v744
        %773 = vmatprep.subr.mxu0 0.0
        %774 = vmatpush1.msra.mxu0 %v743
        %775 = vmatprep.subr.mxu0 0.0
        %776 = vmatpush1.msra.mxu0 %v742
        %777 = vmatprep.subr.mxu0 0.0
        %778 = vmatpush1.msra.mxu0 %v741
        %779 = vmatprep.subr.mxu0 0.0
        %780 = vmatpush1.msra.mxu0 %v740
        %781 = vmatprep.subr.mxu0 0.0
        %782 = vmatpush1.msra.mxu0 %v739
        %783 = vmatprep.subr.mxu0 0.0
        %784 = vmatpush1.msra.mxu0 %v738
        %785 = vmatprep.subr.mxu0 0.0
        %786 = vmatpush1.msra.mxu0 %v737
        %787 = vmatprep.subr.mxu0 0.0
        %788 = vmatpush1.msra.mxu0 %v736
        %789 = vmatprep.subr.mxu0 0.0
        %790 = vmatpush1.msra.mxu0 %v735
        %791 = vmatprep.subr.mxu0 0.0
        %792 = vmatpush2.msra.mxu0 0.0
        %793 = vmatprep.subr.mxu0 0.0
        %794 = vmatpush2.msra.mxu0 0.0
        %795 = vmatprep.subr.mxu0 0.0
        %796 = vmatpush2.msra.mxu0 0.0
        %797 = vmatprep.subr.mxu0 0.0
        %798 = vmatpush2.msra.mxu0 0.0
        %799 = vmatprep.subr.mxu0 0.0
        %800 = vmatpush2.msra.mxu0 0.0
        %801 = vmatprep.subr.mxu0 0.0
        %802 = vmatpush2.msra.mxu0 0.0
        %803 = vmatprep.subr.mxu0 0.0
        %804 = vmatpush2.msra.mxu0 0.0
        %805 = vmatprep.subr.mxu0 0.0
        %806 = vmatpush2.msra.mxu0 0.0
        %807 = vmatprep.subr.mxu0 0.0
        %808 = vmatpush2.msra.mxu0 0.0
        %809 = vmatprep.subr.mxu0 0.0
        %810 = vmatpush2.msra.mxu0 0.0
        %811 = vmatprep.subr.mxu0 0.0
        %812 = vmatpush2.msra.mxu0 0.0
        %813 = vmatprep.subr.mxu0 0.0
        %814 = vmatpush2.msra.mxu0 0.0
        %815 = vmatprep.subr.mxu0 0.0
        %816 = vmatpush2.msra.mxu0 0.0
        %817 = vmatprep.subr.mxu0 0.0
        %818 = vmatpush2.msra.mxu0 0.0
        %819 = vmatprep.subr.mxu0 0.0
        %820 = vmatpush2.msra.mxu0 0.0
        %821 = vmatprep.subr.mxu0 0.0
        %822 = vmatpush2.msra.mxu0 0.0
        %823 = vmatprep.mubr.f32.mxu0 0.0
        %824 = vmatmul.mubr.f32.gmra.mxu0 %v718
        %v825 = vpop.f32.mrf.mxu0
        %v826 = vadd.f32 %v757, %v825
        %v827 = vpop.f32.mrf.mxu0
        %828 = vmatprep.mubr.f32.mxu0 0.0
        %829 = vmatmul.mubr.f32.gmra.mxu0 %v719
        %v830 = vpop.f32.mrf.mxu0
        %v831 = vadd.f32 %v757, %v830
        %v832 = vpop.f32.mrf.mxu0
        %833 = vmatprep.mubr.f32.mxu0 0.0
        %834 = vmatmul.mubr.f32.gmra.mxu0 %v720
        %v835 = vpop.f32.mrf.mxu0
        %v836 = vadd.f32 %v757, %v835
        %v837 = vpop.f32.mrf.mxu0
        %838 = vmatprep.mubr.f32.mxu0 0.0
        %839 = vmatmul.mubr.f32.gmra.mxu0 %v721
        %v840 = vpop.f32.mrf.mxu0
        %v841 = vadd.f32 %v757, %v840
        %v842 = vpop.f32.mrf.mxu0
        %843 = vmatprep.mubr.f32.mxu0 0.0
        %844 = vmatmul.mubr.f32.gmra.mxu0 %v722
        %v845 = vpop.f32.mrf.mxu0
        %v846 = vadd.f32 %v757, %v845
        %v847 = vpop.f32.mrf.mxu0
        %848 = vmatprep.mubr.f32.mxu0 0.0
        %849 = vmatmul.mubr.f32.gmra.mxu0 %v723
        %v850 = vpop.f32.mrf.mxu0
        %v851 = vadd.f32 %v757, %v850
        %v852 = vpop.f32.mrf.mxu0
        %853 = vmatprep.mubr.f32.mxu0 0.0
        %854 = vmatmul.mubr.f32.gmra.mxu0 %v724
        %v855 = vpop.f32.mrf.mxu0
        %v856 = vadd.f32 %v757, %v855
        %v857 = vpop.f32.mrf.mxu0
        %858 = vmatprep.mubr.f32.mxu0 0.0
        %859 = vmatmul.mubr.f32.gmra.mxu0 %v725
        %v860 = vpop.f32.mrf.mxu0
        %v861 = vadd.f32 %v757, %v860
        %v862 = vpop.f32.mrf.mxu0
        %863 = vmatprep.mubr.f32.mxu0 0.0
        %864 = vmatmul.mubr.f32.gmra.mxu0 %v726
        %v865 = vpop.f32.mrf.mxu0
        %v866 = vadd.f32 %v757, %v865
        %v867 = vpop.f32.mrf.mxu0
        %868 = vmatprep.mubr.f32.mxu0 0.0
        %869 = vmatmul.mubr.f32.gmra.mxu0 %v727
        %v870 = vpop.f32.mrf.mxu0
        %v871 = vadd.f32 %v757, %v870
        %v872 = vpop.f32.mrf.mxu0
        %873 = vmatprep.mubr.f32.mxu0 0.0
        %874 = vmatmul.mubr.f32.gmra.mxu0 %v728
        %v875 = vpop.f32.mrf.mxu0
        %v876 = vadd.f32 %v757, %v875
        %v877 = vpop.f32.mrf.mxu0
        %878 = vmatprep.mubr.f32.mxu0 0.0
        %879 = vmatmul.mubr.f32.gmra.mxu0 %v729
        %v880 = vpop.f32.mrf.mxu0
        %v881 = vadd.f32 %v757, %v880
        %v882 = vpop.f32.mrf.mxu0
        %883 = vmatprep.mubr.f32.mxu0 0.0
        %884 = vmatmul.mubr.f32.gmra.mxu0 %v730
        %v885 = vpop.f32.mrf.mxu0
        %v886 = vadd.f32 %v757, %v885
        %v887 = vpop.f32.mrf.mxu0
        %888 = vmatprep.mubr.f32.mxu0 0.0
        %889 = vmatmul.mubr.f32.gmra.mxu0 %v731
        %v890 = vpop.f32.mrf.mxu0
        %v891 = vadd.f32 %v757, %v890
        %v892 = vpop.f32.mrf.mxu0
        %893 = vmatprep.mubr.f32.mxu0 0.0
        %894 = vmatmul.mubr.f32.gmra.mxu0 %v732
        %v895 = vpop.f32.mrf.mxu0
        %v896 = vadd.f32 %v757, %v895
        %v897 = vpop.f32.mrf.mxu0
        %898 = vmatprep.mubr.f32.mxu0 0.0
        %899 = vmatmul.mubr.f32.gmra.mxu0 %v733
        %v900 = vpop.f32.mrf.mxu0
        %v901 = vadd.f32 %v757, %v900
        %v902 = vpop.f32.mrf.mxu0
        %903 = vdwg.mxu0
        %v904 = vmul.f32 %v826, 0.2
        %v905 = vmul.f32 %v831, 0.2
        %v906 = vmul.f32 %v836, 0.2
        %v907 = vmul.f32 %v841, 0.2
        %v908 = vmul.f32 %v846, 0.2
        %v909 = vmul.f32 %v851, 0.2
        %v910 = vmul.f32 %v856, 0.2
        %v911 = vmul.f32 %v861, 0.2
        %v912 = vmul.f32 %v866, 0.2
        %v913 = vmul.f32 %v871, 0.2
        %v914 = vmul.f32 %v876, 0.2
        %v915 = vmul.f32 %v881, 0.2
        %v916 = vmul.f32 %v886, 0.2
        %v917 = vmul.f32 %v891, 0.2
        %v918 = vmul.f32 %v896, 0.2
        %v919 = vmul.f32 %v901, 0.2
        %v920 = vmax.f32 %v826, %v904
        %v921 = vmax.f32 %v831, %v905
        %v922 = vmax.f32 %v836, %v906
        %v923 = vmax.f32 %v841, %v907
        %v924 = vmax.f32 %v846, %v908
        %v925 = vmax.f32 %v851, %v909
        %v926 = vmax.f32 %v856, %v910
        %v927 = vmax.f32 %v861, %v911
        %v928 = vmax.f32 %v866, %v912
        %v929 = vmax.f32 %v871, %v913
        %v930 = vmax.f32 %v876, %v914
        %v931 = vmax.f32 %v881, %v915
        %v932 = vmax.f32 %v886, %v916
        %v933 = vmax.f32 %v891, %v917
        %v934 = vmax.f32 %v896, %v918
        %v935 = vmax.f32 %v901, %v919
        %s936 = scalar_lea.vmem [#allocation5], 384
        %v937 = vld [vmem:[%s936] sm:$0xff]
        %v938 = vld [vmem:[%s936 + $0x8] sm:$0xff]
        %v939 = vld [vmem:[%s936 + $0x10] sm:$0xff]
        %v940 = vld [vmem:[%s936 + $0x18] sm:$0xff]
        %v941 = vld [vmem:[%s936 + $0x20] sm:$0xff]
        %v942 = vld [vmem:[%s936 + $0x28] sm:$0xff]
        %v943 = vld [vmem:[%s936 + $0x30] sm:$0xff]
        %v944 = vld [vmem:[%s936 + $0x38] sm:$0xff]
        %v945 = vld [vmem:[%s936 + $0x40] sm:$0xff]
        %v946 = vld [vmem:[%s936 + $0x48] sm:$0xff]
        %v947 = vld [vmem:[%s936 + $0x50] sm:$0xff]
        %v948 = vld [vmem:[%s936 + $0x58] sm:$0xff]
        %v949 = vld [vmem:[%s936 + $0x60] sm:$0xff]
        %v950 = vld [vmem:[%s936 + $0x68] sm:$0xff]
        %v951 = vld [vmem:[%s936 + $0x70] sm:$0xff]
        %v952 = vld [vmem:[%s936 + $0x78] sm:$0xff]
        %s953 = scalar_lea.vmem [#allocation7], 3
        %v954 = vld [vmem:[%s953] sm:$0x1]
        %v956 = vlaneseq
        %v957 = vshrl.u32 %v956, 7
        %v958 = vsub.s32 0, %v957
        %v959 = vrot.slane %v954, %v958
        %961 = vmatprep.subr.mxu0 0.0
        %962 = vmatpush1.msra.mxu0 %v952
        %963 = vmatprep.subr.mxu0 0.0
        %964 = vmatpush1.msra.mxu0 %v951
        %965 = vmatprep.subr.mxu0 0.0
        %966 = vmatpush1.msra.mxu0 %v950
        %967 = vmatprep.subr.mxu0 0.0
        %968 = vmatpush1.msra.mxu0 %v949
        %969 = vmatprep.subr.mxu0 0.0
        %970 = vmatpush1.msra.mxu0 %v948
        %971 = vmatprep.subr.mxu0 0.0
        %972 = vmatpush1.msra.mxu0 %v947
        %973 = vmatprep.subr.mxu0 0.0
        %974 = vmatpush1.msra.mxu0 %v946
        %975 = vmatprep.subr.mxu0 0.0
        %976 = vmatpush1.msra.mxu0 %v945
        %977 = vmatprep.subr.mxu0 0.0
        %978 = vmatpush1.msra.mxu0 %v944
        %979 = vmatprep.subr.mxu0 0.0
        %980 = vmatpush1.msra.mxu0 %v943
        %981 = vmatprep.subr.mxu0 0.0
        %982 = vmatpush1.msra.mxu0 %v942
        %983 = vmatprep.subr.mxu0 0.0
        %984 = vmatpush1.msra.mxu0 %v941
        %985 = vmatprep.subr.mxu0 0.0
        %986 = vmatpush1.msra.mxu0 %v940
        %987 = vmatprep.subr.mxu0 0.0
        %988 = vmatpush1.msra.mxu0 %v939
        %989 = vmatprep.subr.mxu0 0.0
        %990 = vmatpush1.msra.mxu0 %v938
        %991 = vmatprep.subr.mxu0 0.0
        %992 = vmatpush1.msra.mxu0 %v937
        %993 = vmatprep.subr.mxu0 0.0
        %994 = vmatpush2.msra.mxu0 0.0
        %995 = vmatprep.subr.mxu0 0.0
        %996 = vmatpush2.msra.mxu0 0.0
        %997 = vmatprep.subr.mxu0 0.0
        %998 = vmatpush2.msra.mxu0 0.0
        %999 = vmatprep.subr.mxu0 0.0
        %1000 = vmatpush2.msra.mxu0 0.0
        %1001 = vmatprep.subr.mxu0 0.0
        %1002 = vmatpush2.msra.mxu0 0.0
        %1003 = vmatprep.subr.mxu0 0.0
        %1004 = vmatpush2.msra.mxu0 0.0
        %1005 = vmatprep.subr.mxu0 0.0
        %1006 = vmatpush2.msra.mxu0 0.0
        %1007 = vmatprep.subr.mxu0 0.0
        %1008 = vmatpush2.msra.mxu0 0.0
        %1009 = vmatprep.subr.mxu0 0.0
        %1010 = vmatpush2.msra.mxu0 0.0
        %1011 = vmatprep.subr.mxu0 0.0
        %1012 = vmatpush2.msra.mxu0 0.0
        %1013 = vmatprep.subr.mxu0 0.0
        %1014 = vmatpush2.msra.mxu0 0.0
        %1015 = vmatprep.subr.mxu0 0.0
        %1016 = vmatpush2.msra.mxu0 0.0
        %1017 = vmatprep.subr.mxu0 0.0
        %1018 = vmatpush2.msra.mxu0 0.0
        %1019 = vmatprep.subr.mxu0 0.0
        %1020 = vmatpush2.msra.mxu0 0.0
        %1021 = vmatprep.subr.mxu0 0.0
        %1022 = vmatpush2.msra.mxu0 0.0
        %1023 = vmatprep.subr.mxu0 0.0
        %1024 = vmatpush2.msra.mxu0 0.0
        %1025 = vmatprep.mubr.f32.mxu0 0.0
        %1026 = vmatmul.mubr.f32.gmra.mxu0 %v920
        %v1027 = vpop.f32.mrf.mxu0
        %v1028 = vadd.f32 %v959, %v1027
        %v1029 = vpop.f32.mrf.mxu0
        %1030 = vmatprep.mubr.f32.mxu0 0.0
        %1031 = vmatmul.mubr.f32.gmra.mxu0 %v921
        %v1032 = vpop.f32.mrf.mxu0
        %v1033 = vadd.f32 %v959, %v1032
        %v1034 = vpop.f32.mrf.mxu0
        %1035 = vmatprep.mubr.f32.mxu0 0.0
        %1036 = vmatmul.mubr.f32.gmra.mxu0 %v922
        %v1037 = vpop.f32.mrf.mxu0
        %v1038 = vadd.f32 %v959, %v1037
        %v1039 = vpop.f32.mrf.mxu0
        %1040 = vmatprep.mubr.f32.mxu0 0.0
        %1041 = vmatmul.mubr.f32.gmra.mxu0 %v923
        %v1042 = vpop.f32.mrf.mxu0
        %v1043 = vadd.f32 %v959, %v1042
        %v1044 = vpop.f32.mrf.mxu0
        %1045 = vmatprep.mubr.f32.mxu0 0.0
        %1046 = vmatmul.mubr.f32.gmra.mxu0 %v924
        %v1047 = vpop.f32.mrf.mxu0
        %v1048 = vadd.f32 %v959, %v1047
        %v1049 = vpop.f32.mrf.mxu0
        %1050 = vmatprep.mubr.f32.mxu0 0.0
        %1051 = vmatmul.mubr.f32.gmra.mxu0 %v925
        %v1052 = vpop.f32.mrf.mxu0
        %v1053 = vadd.f32 %v959, %v1052
        %v1054 = vpop.f32.mrf.mxu0
        %1055 = vmatprep.mubr.f32.mxu0 0.0
        %1056 = vmatmul.mubr.f32.gmra.mxu0 %v926
        %v1057 = vpop.f32.mrf.mxu0
        %v1058 = vadd.f32 %v959, %v1057
        %v1059 = vpop.f32.mrf.mxu0
        %1060 = vmatprep.mubr.f32.mxu0 0.0
        %1061 = vmatmul.mubr.f32.gmra.mxu0 %v927
        %v1062 = vpop.f32.mrf.mxu0
        %v1063 = vadd.f32 %v959, %v1062
        %v1064 = vpop.f32.mrf.mxu0
        %1065 = vmatprep.mubr.f32.mxu0 0.0
        %1066 = vmatmul.mubr.f32.gmra.mxu0 %v928
        %v1067 = vpop.f32.mrf.mxu0
        %v1068 = vadd.f32 %v959, %v1067
        %v1069 = vpop.f32.mrf.mxu0
        %1070 = vmatprep.mubr.f32.mxu0 0.0
        %1071 = vmatmul.mubr.f32.gmra.mxu0 %v929
        %v1072 = vpop.f32.mrf.mxu0
        %v1073 = vadd.f32 %v959, %v1072
        %v1074 = vpop.f32.mrf.mxu0
        %1075 = vmatprep.mubr.f32.mxu0 0.0
        %1076 = vmatmul.mubr.f32.gmra.mxu0 %v930
        %v1077 = vpop.f32.mrf.mxu0
        %v1078 = vadd.f32 %v959, %v1077
        %v1079 = vpop.f32.mrf.mxu0
        %1080 = vmatprep.mubr.f32.mxu0 0.0
        %1081 = vmatmul.mubr.f32.gmra.mxu0 %v931
        %v1082 = vpop.f32.mrf.mxu0
        %v1083 = vadd.f32 %v959, %v1082
        %v1084 = vpop.f32.mrf.mxu0
        %1085 = vmatprep.mubr.f32.mxu0 0.0
        %1086 = vmatmul.mubr.f32.gmra.mxu0 %v932
        %v1087 = vpop.f32.mrf.mxu0
        %v1088 = vadd.f32 %v959, %v1087
        %v1089 = vpop.f32.mrf.mxu0
        %1090 = vmatprep.mubr.f32.mxu0 0.0
        %1091 = vmatmul.mubr.f32.gmra.mxu0 %v933
        %v1092 = vpop.f32.mrf.mxu0
        %v1093 = vadd.f32 %v959, %v1092
        %v1094 = vpop.f32.mrf.mxu0
        %1095 = vmatprep.mubr.f32.mxu0 0.0
        %1096 = vmatmul.mubr.f32.gmra.mxu0 %v934
        %v1097 = vpop.f32.mrf.mxu0
        %v1098 = vadd.f32 %v959, %v1097
        %v1099 = vpop.f32.mrf.mxu0
        %1100 = vmatprep.mubr.f32.mxu0 0.0
        %1101 = vmatmul.mubr.f32.gmra.mxu0 %v935
        %v1102 = vpop.f32.mrf.mxu0
        %v1103 = vadd.f32 %v959, %v1102
        %v1104 = vpop.f32.mrf.mxu0
        %1105 = vdwg.mxu0
        %v1106 = vmul.f32 %v1028, 0.2
        %v1107 = vmul.f32 %v1033, 0.2
        %v1108 = vmul.f32 %v1038, 0.2
        %v1109 = vmul.f32 %v1043, 0.2
        %v1110 = vmul.f32 %v1048, 0.2
        %v1111 = vmul.f32 %v1053, 0.2
        %v1112 = vmul.f32 %v1058, 0.2
        %v1113 = vmul.f32 %v1063, 0.2
        %v1114 = vmul.f32 %v1068, 0.2
        %v1115 = vmul.f32 %v1073, 0.2
        %v1116 = vmul.f32 %v1078, 0.2
        %v1117 = vmul.f32 %v1083, 0.2
        %v1118 = vmul.f32 %v1088, 0.2
        %v1119 = vmul.f32 %v1093, 0.2
        %v1120 = vmul.f32 %v1098, 0.2
        %v1121 = vmul.f32 %v1103, 0.2
        %v1122 = vmax.f32 %v1028, %v1106
        %v1123 = vmax.f32 %v1033, %v1107
        %v1124 = vmax.f32 %v1038, %v1108
        %v1125 = vmax.f32 %v1043, %v1109
        %v1126 = vmax.f32 %v1048, %v1110
        %v1127 = vmax.f32 %v1053, %v1111
        %v1128 = vmax.f32 %v1058, %v1112
        %v1129 = vmax.f32 %v1063, %v1113
        %v1130 = vmax.f32 %v1068, %v1114
        %v1131 = vmax.f32 %v1073, %v1115
        %v1132 = vmax.f32 %v1078, %v1116
        %v1133 = vmax.f32 %v1083, %v1117
        %v1134 = vmax.f32 %v1088, %v1118
        %v1135 = vmax.f32 %v1093, %v1119
        %v1136 = vmax.f32 %v1098, %v1120
        %v1137 = vmax.f32 %v1103, %v1121
        %s1138 = scalar_lea.vmem [#allocation5], 512
        %v1139 = vld [vmem:[%s1138] sm:$0xff]
        %v1140 = vld [vmem:[%s1138 + $0x8] sm:$0xff]
        %v1141 = vld [vmem:[%s1138 + $0x10] sm:$0xff]
        %v1142 = vld [vmem:[%s1138 + $0x18] sm:$0xff]
        %v1143 = vld [vmem:[%s1138 + $0x20] sm:$0xff]
        %v1144 = vld [vmem:[%s1138 + $0x28] sm:$0xff]
        %v1145 = vld [vmem:[%s1138 + $0x30] sm:$0xff]
        %v1146 = vld [vmem:[%s1138 + $0x38] sm:$0xff]
        %v1147 = vld [vmem:[%s1138 + $0x40] sm:$0xff]
        %v1148 = vld [vmem:[%s1138 + $0x48] sm:$0xff]
        %v1149 = vld [vmem:[%s1138 + $0x50] sm:$0xff]
        %v1150 = vld [vmem:[%s1138 + $0x58] sm:$0xff]
        %v1151 = vld [vmem:[%s1138 + $0x60] sm:$0xff]
        %v1152 = vld [vmem:[%s1138 + $0x68] sm:$0xff]
        %v1153 = vld [vmem:[%s1138 + $0x70] sm:$0xff]
        %v1154 = vld [vmem:[%s1138 + $0x78] sm:$0xff]
        %s1155 = scalar_lea.vmem [#allocation7], 4
        %v1156 = vld [vmem:[%s1155] sm:$0x1]
        %v1158 = vlaneseq
        %v1159 = vshrl.u32 %v1158, 7
        %v1160 = vsub.s32 0, %v1159
        %v1161 = vrot.slane %v1156, %v1160
        %1163 = vmatprep.subr.mxu0 0.0
        %1164 = vmatpush1.msra.mxu0 %v1154
        %1165 = vmatprep.subr.mxu0 0.0
        %1166 = vmatpush1.msra.mxu0 %v1153
        %1167 = vmatprep.subr.mxu0 0.0
        %1168 = vmatpush1.msra.mxu0 %v1152
        %1169 = vmatprep.subr.mxu0 0.0
        %1170 = vmatpush1.msra.mxu0 %v1151
        %1171 = vmatprep.subr.mxu0 0.0
        %1172 = vmatpush1.msra.mxu0 %v1150
        %1173 = vmatprep.subr.mxu0 0.0
        %1174 = vmatpush1.msra.mxu0 %v1149
        %1175 = vmatprep.subr.mxu0 0.0
        %1176 = vmatpush1.msra.mxu0 %v1148
        %1177 = vmatprep.subr.mxu0 0.0
        %1178 = vmatpush1.msra.mxu0 %v1147
        %1179 = vmatprep.subr.mxu0 0.0
        %1180 = vmatpush1.msra.mxu0 %v1146
        %1181 = vmatprep.subr.mxu0 0.0
        %1182 = vmatpush1.msra.mxu0 %v1145
        %1183 = vmatprep.subr.mxu0 0.0
        %1184 = vmatpush1.msra.mxu0 %v1144
        %1185 = vmatprep.subr.mxu0 0.0
        %1186 = vmatpush1.msra.mxu0 %v1143
        %1187 = vmatprep.subr.mxu0 0.0
        %1188 = vmatpush1.msra.mxu0 %v1142
        %1189 = vmatprep.subr.mxu0 0.0
        %1190 = vmatpush1.msra.mxu0 %v1141
        %1191 = vmatprep.subr.mxu0 0.0
        %1192 = vmatpush1.msra.mxu0 %v1140
        %1193 = vmatprep.subr.mxu0 0.0
        %1194 = vmatpush1.msra.mxu0 %v1139
        %1195 = vmatprep.subr.mxu0 0.0
        %1196 = vmatpush2.msra.mxu0 0.0
        %1197 = vmatprep.subr.mxu0 0.0
        %1198 = vmatpush2.msra.mxu0 0.0
        %1199 = vmatprep.subr.mxu0 0.0
        %1200 = vmatpush2.msra.mxu0 0.0
        %1201 = vmatprep.subr.mxu0 0.0
        %1202 = vmatpush2.msra.mxu0 0.0
        %1203 = vmatprep.subr.mxu0 0.0
        %1204 = vmatpush2.msra.mxu0 0.0
        %1205 = vmatprep.subr.mxu0 0.0
        %1206 = vmatpush2.msra.mxu0 0.0
        %1207 = vmatprep.subr.mxu0 0.0
        %1208 = vmatpush2.msra.mxu0 0.0
        %1209 = vmatprep.subr.mxu0 0.0
        %1210 = vmatpush2.msra.mxu0 0.0
        %1211 = vmatprep.subr.mxu0 0.0
        %1212 = vmatpush2.msra.mxu0 0.0
        %1213 = vmatprep.subr.mxu0 0.0
        %1214 = vmatpush2.msra.mxu0 0.0
        %1215 = vmatprep.subr.mxu0 0.0
        %1216 = vmatpush2.msra.mxu0 0.0
        %1217 = vmatprep.subr.mxu0 0.0
        %1218 = vmatpush2.msra.mxu0 0.0
        %1219 = vmatprep.subr.mxu0 0.0
        %1220 = vmatpush2.msra.mxu0 0.0
        %1221 = vmatprep.subr.mxu0 0.0
        %1222 = vmatpush2.msra.mxu0 0.0
        %1223 = vmatprep.subr.mxu0 0.0
        %1224 = vmatpush2.msra.mxu0 0.0
        %1225 = vmatprep.subr.mxu0 0.0
        %1226 = vmatpush2.msra.mxu0 0.0
        %1227 = vmatprep.mubr.f32.mxu0 0.0
        %1228 = vmatmul.mubr.f32.gmra.mxu0 %v1122
        %v1229 = vpop.f32.mrf.mxu0
        %v1230 = vadd.f32 %v1161, %v1229
        %v1231 = vpop.f32.mrf.mxu0
        %1232 = vmatprep.mubr.f32.mxu0 0.0
        %1233 = vmatmul.mubr.f32.gmra.mxu0 %v1123
        %v1234 = vpop.f32.mrf.mxu0
        %v1235 = vadd.f32 %v1161, %v1234
        %v1236 = vpop.f32.mrf.mxu0
        %1237 = vmatprep.mubr.f32.mxu0 0.0
        %1238 = vmatmul.mubr.f32.gmra.mxu0 %v1124
        %v1239 = vpop.f32.mrf.mxu0
        %v1240 = vadd.f32 %v1161, %v1239
        %v1241 = vpop.f32.mrf.mxu0
        %1242 = vmatprep.mubr.f32.mxu0 0.0
        %1243 = vmatmul.mubr.f32.gmra.mxu0 %v1125
        %v1244 = vpop.f32.mrf.mxu0
        %v1245 = vadd.f32 %v1161, %v1244
        %v1246 = vpop.f32.mrf.mxu0
        %1247 = vmatprep.mubr.f32.mxu0 0.0
        %1248 = vmatmul.mubr.f32.gmra.mxu0 %v1126
        %v1249 = vpop.f32.mrf.mxu0
        %v1250 = vadd.f32 %v1161, %v1249
        %v1251 = vpop.f32.mrf.mxu0
        %1252 = vmatprep.mubr.f32.mxu0 0.0
        %1253 = vmatmul.mubr.f32.gmra.mxu0 %v1127
        %v1254 = vpop.f32.mrf.mxu0
        %v1255 = vadd.f32 %v1161, %v1254
        %v1256 = vpop.f32.mrf.mxu0
        %1257 = vmatprep.mubr.f32.mxu0 0.0
        %1258 = vmatmul.mubr.f32.gmra.mxu0 %v1128
        %v1259 = vpop.f32.mrf.mxu0
        %v1260 = vadd.f32 %v1161, %v1259
        %v1261 = vpop.f32.mrf.mxu0
        %1262 = vmatprep.mubr.f32.mxu0 0.0
        %1263 = vmatmul.mubr.f32.gmra.mxu0 %v1129
        %v1264 = vpop.f32.mrf.mxu0
        %v1265 = vadd.f32 %v1161, %v1264
        %v1266 = vpop.f32.mrf.mxu0
        %1267 = vmatprep.mubr.f32.mxu0 0.0
        %1268 = vmatmul.mubr.f32.gmra.mxu0 %v1130
        %v1269 = vpop.f32.mrf.mxu0
        %v1270 = vadd.f32 %v1161, %v1269
        %v1271 = vpop.f32.mrf.mxu0
        %1272 = vmatprep.mubr.f32.mxu0 0.0
        %1273 = vmatmul.mubr.f32.gmra.mxu0 %v1131
        %v1274 = vpop.f32.mrf.mxu0
        %v1275 = vadd.f32 %v1161, %v1274
        %v1276 = vpop.f32.mrf.mxu0
        %1277 = vmatprep.mubr.f32.mxu0 0.0
        %1278 = vmatmul.mubr.f32.gmra.mxu0 %v1132
        %v1279 = vpop.f32.mrf.mxu0
        %v1280 = vadd.f32 %v1161, %v1279
        %v1281 = vpop.f32.mrf.mxu0
        %1282 = vmatprep.mubr.f32.mxu0 0.0
        %1283 = vmatmul.mubr.f32.gmra.mxu0 %v1133
        %v1284 = vpop.f32.mrf.mxu0
        %v1285 = vadd.f32 %v1161, %v1284
        %v1286 = vpop.f32.mrf.mxu0
        %1287 = vmatprep.mubr.f32.mxu0 0.0
        %1288 = vmatmul.mubr.f32.gmra.mxu0 %v1134
        %v1289 = vpop.f32.mrf.mxu0
        %v1290 = vadd.f32 %v1161, %v1289
        %v1291 = vpop.f32.mrf.mxu0
        %1292 = vmatprep.mubr.f32.mxu0 0.0
        %1293 = vmatmul.mubr.f32.gmra.mxu0 %v1135
        %v1294 = vpop.f32.mrf.mxu0
        %v1295 = vadd.f32 %v1161, %v1294
        %v1296 = vpop.f32.mrf.mxu0
        %1297 = vmatprep.mubr.f32.mxu0 0.0
        %1298 = vmatmul.mubr.f32.gmra.mxu0 %v1136
        %v1299 = vpop.f32.mrf.mxu0
        %v1300 = vadd.f32 %v1161, %v1299
        %v1301 = vpop.f32.mrf.mxu0
        %1302 = vmatprep.mubr.f32.mxu0 0.0
        %1303 = vmatmul.mubr.f32.gmra.mxu0 %v1137
        %v1304 = vpop.f32.mrf.mxu0
        %v1305 = vadd.f32 %v1161, %v1304
        %v1306 = vpop.f32.mrf.mxu0
        %1307 = vdwg.mxu0
        %v1308 = vmul.f32 %v1230, 0.2
        %v1309 = vmul.f32 %v1235, 0.2
        %v1310 = vmul.f32 %v1240, 0.2
        %v1311 = vmul.f32 %v1245, 0.2
        %v1312 = vmul.f32 %v1250, 0.2
        %v1313 = vmul.f32 %v1255, 0.2
        %v1314 = vmul.f32 %v1260, 0.2
        %v1315 = vmul.f32 %v1265, 0.2
        %v1316 = vmul.f32 %v1270, 0.2
        %v1317 = vmul.f32 %v1275, 0.2
        %v1318 = vmul.f32 %v1280, 0.2
        %v1319 = vmul.f32 %v1285, 0.2
        %v1320 = vmul.f32 %v1290, 0.2
        %v1321 = vmul.f32 %v1295, 0.2
        %v1322 = vmul.f32 %v1300, 0.2
        %v1323 = vmul.f32 %v1305, 0.2
        %v1324 = vmax.f32 %v1230, %v1308
        %v1325 = vmax.f32 %v1235, %v1309
        %v1326 = vmax.f32 %v1240, %v1310
        %v1327 = vmax.f32 %v1245, %v1311
        %v1328 = vmax.f32 %v1250, %v1312
        %v1329 = vmax.f32 %v1255, %v1313
        %v1330 = vmax.f32 %v1260, %v1314
        %v1331 = vmax.f32 %v1265, %v1315
        %v1332 = vmax.f32 %v1270, %v1316
        %v1333 = vmax.f32 %v1275, %v1317
        %v1334 = vmax.f32 %v1280, %v1318
        %v1335 = vmax.f32 %v1285, %v1319
        %v1336 = vmax.f32 %v1290, %v1320
        %v1337 = vmax.f32 %v1295, %v1321
        %v1338 = vmax.f32 %v1300, %v1322
        %v1339 = vmax.f32 %v1305, %v1323
        %s1340 = scalar_lea.vmem [#allocation5], 640
        %v1341 = vld [vmem:[%s1340] sm:$0xff]
        %v1342 = vld [vmem:[%s1340 + $0x8] sm:$0xff]
        %v1343 = vld [vmem:[%s1340 + $0x10] sm:$0xff]
        %v1344 = vld [vmem:[%s1340 + $0x18] sm:$0xff]
        %v1345 = vld [vmem:[%s1340 + $0x20] sm:$0xff]
        %v1346 = vld [vmem:[%s1340 + $0x28] sm:$0xff]
        %v1347 = vld [vmem:[%s1340 + $0x30] sm:$0xff]
        %v1348 = vld [vmem:[%s1340 + $0x38] sm:$0xff]
        %v1349 = vld [vmem:[%s1340 + $0x40] sm:$0xff]
        %v1350 = vld [vmem:[%s1340 + $0x48] sm:$0xff]
        %v1351 = vld [vmem:[%s1340 + $0x50] sm:$0xff]
        %v1352 = vld [vmem:[%s1340 + $0x58] sm:$0xff]
        %v1353 = vld [vmem:[%s1340 + $0x60] sm:$0xff]
        %v1354 = vld [vmem:[%s1340 + $0x68] sm:$0xff]
        %v1355 = vld [vmem:[%s1340 + $0x70] sm:$0xff]
        %v1356 = vld [vmem:[%s1340 + $0x78] sm:$0xff]
        %s1357 = scalar_lea.vmem [#allocation7], 5
        %v1358 = vld [vmem:[%s1357] sm:$0x1]
        %v1360 = vlaneseq
        %v1361 = vshrl.u32 %v1360, 7
        %v1362 = vsub.s32 0, %v1361
        %v1363 = vrot.slane %v1358, %v1362
        %1365 = vmatprep.subr.mxu0 0.0
        %1366 = vmatpush1.msra.mxu0 %v1356
        %1367 = vmatprep.subr.mxu0 0.0
        %1368 = vmatpush1.msra.mxu0 %v1355
        %1369 = vmatprep.subr.mxu0 0.0
        %1370 = vmatpush1.msra.mxu0 %v1354
        %1371 = vmatprep.subr.mxu0 0.0
        %1372 = vmatpush1.msra.mxu0 %v1353
        %1373 = vmatprep.subr.mxu0 0.0
        %1374 = vmatpush1.msra.mxu0 %v1352
        %1375 = vmatprep.subr.mxu0 0.0
        %1376 = vmatpush1.msra.mxu0 %v1351
        %1377 = vmatprep.subr.mxu0 0.0
        %1378 = vmatpush1.msra.mxu0 %v1350
        %1379 = vmatprep.subr.mxu0 0.0
        %1380 = vmatpush1.msra.mxu0 %v1349
        %1381 = vmatprep.subr.mxu0 0.0
        %1382 = vmatpush1.msra.mxu0 %v1348
        %1383 = vmatprep.subr.mxu0 0.0
        %1384 = vmatpush1.msra.mxu0 %v1347
        %1385 = vmatprep.subr.mxu0 0.0
        %1386 = vmatpush1.msra.mxu0 %v1346
        %1387 = vmatprep.subr.mxu0 0.0
        %1388 = vmatpush1.msra.mxu0 %v1345
        %1389 = vmatprep.subr.mxu0 0.0
        %1390 = vmatpush1.msra.mxu0 %v1344
        %1391 = vmatprep.subr.mxu0 0.0
        %1392 = vmatpush1.msra.mxu0 %v1343
        %1393 = vmatprep.subr.mxu0 0.0
        %1394 = vmatpush1.msra.mxu0 %v1342
        %1395 = vmatprep.subr.mxu0 0.0
        %1396 = vmatpush1.msra.mxu0 %v1341
        %1397 = vmatprep.subr.mxu0 0.0
        %1398 = vmatpush2.msra.mxu0 0.0
        %1399 = vmatprep.subr.mxu0 0.0
        %1400 = vmatpush2.msra.mxu0 0.0
        %1401 = vmatprep.subr.mxu0 0.0
        %1402 = vmatpush2.msra.mxu0 0.0
        %1403 = vmatprep.subr.mxu0 0.0
        %1404 = vmatpush2.msra.mxu0 0.0
        %1405 = vmatprep.subr.mxu0 0.0
        %1406 = vmatpush2.msra.mxu0 0.0
        %1407 = vmatprep.subr.mxu0 0.0
        %1408 = vmatpush2.msra.mxu0 0.0
        %1409 = vmatprep.subr.mxu0 0.0
        %1410 = vmatpush2.msra.mxu0 0.0
        %1411 = vmatprep.subr.mxu0 0.0
        %1412 = vmatpush2.msra.mxu0 0.0
        %1413 = vmatprep.subr.mxu0 0.0
        %1414 = vmatpush2.msra.mxu0 0.0
        %1415 = vmatprep.subr.mxu0 0.0
        %1416 = vmatpush2.msra.mxu0 0.0
        %1417 = vmatprep.subr.mxu0 0.0
        %1418 = vmatpush2.msra.mxu0 0.0
        %1419 = vmatprep.subr.mxu0 0.0
        %1420 = vmatpush2.msra.mxu0 0.0
        %1421 = vmatprep.subr.mxu0 0.0
        %1422 = vmatpush2.msra.mxu0 0.0
        %1423 = vmatprep.subr.mxu0 0.0
        %1424 = vmatpush2.msra.mxu0 0.0
        %1425 = vmatprep.subr.mxu0 0.0
        %1426 = vmatpush2.msra.mxu0 0.0
        %1427 = vmatprep.subr.mxu0 0.0
        %1428 = vmatpush2.msra.mxu0 0.0
        %1429 = vmatprep.mubr.f32.mxu0 0.0
        %1430 = vmatmul.mubr.f32.gmra.mxu0 %v1324
        %v1431 = vpop.f32.mrf.mxu0
        %v1432 = vadd.f32 %v1363, %v1431
        %v1433 = vpop.f32.mrf.mxu0
        %1434 = vmatprep.mubr.f32.mxu0 0.0
        %1435 = vmatmul.mubr.f32.gmra.mxu0 %v1325
        %v1436 = vpop.f32.mrf.mxu0
        %v1437 = vadd.f32 %v1363, %v1436
        %v1438 = vpop.f32.mrf.mxu0
        %1439 = vmatprep.mubr.f32.mxu0 0.0
        %1440 = vmatmul.mubr.f32.gmra.mxu0 %v1326
        %v1441 = vpop.f32.mrf.mxu0
        %v1442 = vadd.f32 %v1363, %v1441
        %v1443 = vpop.f32.mrf.mxu0
        %1444 = vmatprep.mubr.f32.mxu0 0.0
        %1445 = vmatmul.mubr.f32.gmra.mxu0 %v1327
        %v1446 = vpop.f32.mrf.mxu0
        %v1447 = vadd.f32 %v1363, %v1446
        %v1448 = vpop.f32.mrf.mxu0
        %1449 = vmatprep.mubr.f32.mxu0 0.0
        %1450 = vmatmul.mubr.f32.gmra.mxu0 %v1328
        %v1451 = vpop.f32.mrf.mxu0
        %v1452 = vadd.f32 %v1363, %v1451
        %v1453 = vpop.f32.mrf.mxu0
        %1454 = vmatprep.mubr.f32.mxu0 0.0
        %1455 = vmatmul.mubr.f32.gmra.mxu0 %v1329
        %v1456 = vpop.f32.mrf.mxu0
        %v1457 = vadd.f32 %v1363, %v1456
        %v1458 = vpop.f32.mrf.mxu0
        %1459 = vmatprep.mubr.f32.mxu0 0.0
        %1460 = vmatmul.mubr.f32.gmra.mxu0 %v1330
        %v1461 = vpop.f32.mrf.mxu0
        %v1462 = vadd.f32 %v1363, %v1461
        %v1463 = vpop.f32.mrf.mxu0
        %1464 = vmatprep.mubr.f32.mxu0 0.0
        %1465 = vmatmul.mubr.f32.gmra.mxu0 %v1331
        %v1466 = vpop.f32.mrf.mxu0
        %v1467 = vadd.f32 %v1363, %v1466
        %v1468 = vpop.f32.mrf.mxu0
        %1469 = vmatprep.mubr.f32.mxu0 0.0
        %1470 = vmatmul.mubr.f32.gmra.mxu0 %v1332
        %v1471 = vpop.f32.mrf.mxu0
        %v1472 = vadd.f32 %v1363, %v1471
        %v1473 = vpop.f32.mrf.mxu0
        %1474 = vmatprep.mubr.f32.mxu0 0.0
        %1475 = vmatmul.mubr.f32.gmra.mxu0 %v1333
        %v1476 = vpop.f32.mrf.mxu0
        %v1477 = vadd.f32 %v1363, %v1476
        %v1478 = vpop.f32.mrf.mxu0
        %1479 = vmatprep.mubr.f32.mxu0 0.0
        %1480 = vmatmul.mubr.f32.gmra.mxu0 %v1334
        %v1481 = vpop.f32.mrf.mxu0
        %v1482 = vadd.f32 %v1363, %v1481
        %v1483 = vpop.f32.mrf.mxu0
        %1484 = vmatprep.mubr.f32.mxu0 0.0
        %1485 = vmatmul.mubr.f32.gmra.mxu0 %v1335
        %v1486 = vpop.f32.mrf.mxu0
        %v1487 = vadd.f32 %v1363, %v1486
        %v1488 = vpop.f32.mrf.mxu0
        %1489 = vmatprep.mubr.f32.mxu0 0.0
        %1490 = vmatmul.mubr.f32.gmra.mxu0 %v1336
        %v1491 = vpop.f32.mrf.mxu0
        %v1492 = vadd.f32 %v1363, %v1491
        %v1493 = vpop.f32.mrf.mxu0
        %1494 = vmatprep.mubr.f32.mxu0 0.0
        %1495 = vmatmul.mubr.f32.gmra.mxu0 %v1337
        %v1496 = vpop.f32.mrf.mxu0
        %v1497 = vadd.f32 %v1363, %v1496
        %v1498 = vpop.f32.mrf.mxu0
        %1499 = vmatprep.mubr.f32.mxu0 0.0
        %1500 = vmatmul.mubr.f32.gmra.mxu0 %v1338
        %v1501 = vpop.f32.mrf.mxu0
        %v1502 = vadd.f32 %v1363, %v1501
        %v1503 = vpop.f32.mrf.mxu0
        %1504 = vmatprep.mubr.f32.mxu0 0.0
        %1505 = vmatmul.mubr.f32.gmra.mxu0 %v1339
        %v1506 = vpop.f32.mrf.mxu0
        %v1507 = vadd.f32 %v1363, %v1506
        %v1508 = vpop.f32.mrf.mxu0
        %1509 = vdwg.mxu0
        %v1510 = vmul.f32 %v1432, 0.2
        %v1511 = vmul.f32 %v1437, 0.2
        %v1512 = vmul.f32 %v1442, 0.2
        %v1513 = vmul.f32 %v1447, 0.2
        %v1514 = vmul.f32 %v1452, 0.2
        %v1515 = vmul.f32 %v1457, 0.2
        %v1516 = vmul.f32 %v1462, 0.2
        %v1517 = vmul.f32 %v1467, 0.2
        %v1518 = vmul.f32 %v1472, 0.2
        %v1519 = vmul.f32 %v1477, 0.2
        %v1520 = vmul.f32 %v1482, 0.2
        %v1521 = vmul.f32 %v1487, 0.2
        %v1522 = vmul.f32 %v1492, 0.2
        %v1523 = vmul.f32 %v1497, 0.2
        %v1524 = vmul.f32 %v1502, 0.2
        %v1525 = vmul.f32 %v1507, 0.2
        %v1526 = vmax.f32 %v1432, %v1510
        %v1527 = vmax.f32 %v1437, %v1511
        %v1528 = vmax.f32 %v1442, %v1512
        %v1529 = vmax.f32 %v1447, %v1513
        %v1530 = vmax.f32 %v1452, %v1514
        %v1531 = vmax.f32 %v1457, %v1515
        %v1532 = vmax.f32 %v1462, %v1516
        %v1533 = vmax.f32 %v1467, %v1517
        %v1534 = vmax.f32 %v1472, %v1518
        %v1535 = vmax.f32 %v1477, %v1519
        %v1536 = vmax.f32 %v1482, %v1520
        %v1537 = vmax.f32 %v1487, %v1521
        %v1538 = vmax.f32 %v1492, %v1522
        %v1539 = vmax.f32 %v1497, %v1523
        %v1540 = vmax.f32 %v1502, %v1524
        %v1541 = vmax.f32 %v1507, %v1525
        %1542 = vst [vmem:[%s217] sm:$0xff] %v1526
        %1543 = vst [vmem:[%s217 + $0x8] sm:$0xff] %v1527
        %1544 = vst [vmem:[%s217 + $0x10] sm:$0xff] %v1528
        %1545 = vst [vmem:[%s217 + $0x18] sm:$0xff] %v1529
        %1546 = vst [vmem:[%s217 + $0x20] sm:$0xff] %v1530
        %1547 = vst [vmem:[%s217 + $0x28] sm:$0xff] %v1531
        %1548 = vst [vmem:[%s217 + $0x30] sm:$0xff] %v1532
        %1549 = vst [vmem:[%s217 + $0x38] sm:$0xff] %v1533
        %1550 = vst [vmem:[%s217 + $0x40] sm:$0xff] %v1534
        %1551 = vst [vmem:[%s217 + $0x48] sm:$0xff] %v1535
        %1552 = vst [vmem:[%s217 + $0x50] sm:$0xff] %v1536
        %1553 = vst [vmem:[%s217 + $0x58] sm:$0xff] %v1537
        %1554 = vst [vmem:[%s217 + $0x60] sm:$0xff] %v1538
        %1555 = vst [vmem:[%s217 + $0x68] sm:$0xff] %v1539
        %1556 = vst [vmem:[%s217 + $0x70] sm:$0xff] %v1540
        %1557 = vst [vmem:[%s217 + $0x78] sm:$0xff] %v1541
        %s1558 = sand.u32 %s97, 1
        %s1559 = scalar_lea.sflag [#allocation4], %s1558
        %s1560 = sand.u32 %s97, 1
        %s1561 = smul.addr %s1560, 128
        %s1562 = scalar_lea.vmem [#allocation8], %s1561
        // Predicated region
        $region45: #{tpu_custom_call.1} parent=31 // pred_check
          %p1563 = pneg %p107
        $region46: #{tpu_custom_call.1} parent=31 // pred_check_branch
          %1565 = sbr.rel (%p1563) target = $region48
        $region47: #{tpu_custom_call.1} parent=31 // pred_region
          %s1566 = smul.u32 16, %s21
          %s1568 = ssub.s32 2048, 2048
          %1569 = vsyncadd %s1559, %s1568
          %s1570 = smul.addr %s1566, 128
          %s1571 = scalar_lea.hbm %s3, %s1570
          %s1572 = sshll.u32 %s1562, 4
          %s1573 = int_to_ptr.vmem [resolvable:$true] %s1572
          %1578 = dma.vmem_to_hbm [thread:$0]  %s1573, 2048, %s1571, %s1559, 128, 128, 8
        $region48: #{tpu_custom_call.1} parent=31 // pred_fallthru
          _
      $region32: #{tpu_custom_call.1} parent=5 // pred_fallthru
        _
      %p1579 = scmp.le.s32.totalorder 2, %s16
      // Predicated region
      $region49: #{tpu_custom_call.1} parent=5 // pred_check
        %p1580 = pneg %p1579
      $region50: #{tpu_custom_call.1} parent=5 // pred_check_branch
        %1582 = sbr.rel (%p1580) target = $region52
      $region51: #{tpu_custom_call.1} parent=5 // pred_region
        %s1583 = ssub.s32 %s16, 2
        // Predicated region
        $region53: #{tpu_custom_call.1} parent=51 // pred_check
          %p1584 = pneg %p113
        $region54: #{tpu_custom_call.1} parent=51 // pred_check_branch
          %1586 = sbr.rel (%p1584) target = $region56
        $region55: #{tpu_custom_call.1} parent=51 // pred_region
          %s1587 = sand.u32 %s98, 1
          %s1588 = scalar_lea.sflag [#allocation4], %s1587
          %s1589 = sand.u32 %s98, 1
          %s1590 = smul.addr %s1589, 128
          %s1591 = scalar_lea.vmem [#allocation8], %s1590
          %1592 = dma.done %s1588, 2048
        $region56: #{tpu_custom_call.1} parent=51 // pred_fallthru
          _
      $region52: #{tpu_custom_call.1} parent=5 // pred_fallthru
        _
    $region6: #{tpu_custom_call.1} parent=1 // loop_footer
      %s20 = sadd.s32 1, %s16
    $region7: #{tpu_custom_call.1} parent=1 // loop_footer_branch
      %15 = sbr.rel target = $region3
    $region8: #{tpu_custom_call.1} parent=1 // loop_exit
      _
    %1593 = vsyncpa [#allocation3], 1
    %s1594 = scalar_lea.sflag [#allocation3], 1
    %1595 = vsyncpa %s1594, 1
    %1596 = vsyncpa [#allocation6], 1
    %1597 = vsyncpa [#allocation4], 1
    %s1598 = scalar_lea.sflag [#allocation4], 1
    %1599 = vsyncpa %s1598, 1

</llo_original>
